<compile_context>
chip_gen: v6e
topology: v6e:2x2x1
jax: 0.10.0
libtpu: 0.0.40
codegen_flags: <defaults>
</compile_context>

<pallas_src>
import functools
from typing import NamedTuple, Tuple

import jax
import jax.numpy as jnp
from jax import lax
from jax.experimental import pallas as pl
from jax.experimental.pallas import tpu as pltpu

MAX_DAILY_CHANGE = 0.03

_VMEM_SPEC = pl.BlockSpec(memory_space=pltpu.MemorySpace.VMEM)


class _Cfg(NamedTuple):
    num_layers: int
    hidden: int
    input_size: int
    output_size: int
    reduce_head: bool
    slab_width: int
    offsets: Tuple  # ((name, row_off, rows, cols), ...)


# --------------------------------------------------------------------------
# Fused Pallas kernel: wavefronted L-layer LSTM + fc1/ReLU/fc2/tanh head
# --------------------------------------------------------------------------
def _fused_kernel(cfg, T, Bp, x_ref, slab_ref, out_ref, add_scr):
    """x_ref:   (T*Bp, Din)  time-major, pre-flattened, batch padded to 8
    slab_ref:   (R, W)       packed weight slab (see prepare_params)
    out_ref:    (Bp, O)
    add_scr:    (T*Bp, L*4H) VMEM scratch: hoisted x-projection + all biases
    """
    L, H = cfg.num_layers, cfg.hidden
    G = 4 * H
    LH = L * H
    offs = {name: (o, r, c) for name, o, r, c in cfg.offsets}

    def sl(name):
        o, r, c = offs[name]
        return slab_ref[o:o + r, 0:c]

    # Hoisted layer-0 input projection + every layer's gate bias (gate-major
    # columns, i/f/o pre-scaled by 0.5 for the tanh-only sigmoid trick).
    # One matmul, off the serial recurrence; staged in VMEM to bound vreg
    # live range inside the unrolled wave loop.
    add_scr[...] = (jnp.dot(x_ref[...], sl("wih0"),
                            preferred_element_type=jnp.float32) + sl("bias"))

    rhs = sl("rhs")                       # (L*H, L*4H) fused recurrence weights

    # Lane-concatenated carries: hcat[:, l*H:(l+1)*H] is layer l's h (resp. c).
    hcat = jnp.zeros((Bp, LH), jnp.float32)
    ccat = jnp.zeros((Bp, LH), jnp.float32)

    # Wavefront: wave s computes layer l's cell at time t = s - l.  Fully
    # unrolled (T, L static and small) so all slices/indices are static.
    for s in range(T + L - 1):
        sc = min(s, T - 1)                                  # static clamp
        add_t = add_scr[sc * Bp:(sc + 1) * Bp, :]           # (Bp, L*4H)
        gates = jnp.dot(hcat, rhs, preferred_element_type=jnp.float32) + add_t
        tg = jnp.tanh(gates)              # one wide EUP op for all layers/gates
        sg = 0.5 * tg + 0.5               # sigmoid(x) = 0.5*tanh(x/2)+0.5
        # Gate-major layout: i|f|g|o blocks, each block holds all layers.
        i_g = sg[:, 0 * LH:1 * LH]
        f_g = sg[:, 1 * LH:2 * LH]
        g_g = tg[:, 2 * LH:3 * LH]
        o_g = sg[:, 3 * LH:4 * LH]
        c_new = f_g * ccat + i_g * g_g                      # full-width VPU
        h_new = o_g * jnp.tanh(c_new)                       # one narrow tanh

        active = [l for l in range(L) if 0 <= s - l < T]
        if len(active) == L:
            ccat, hcat = c_new, h_new
        else:
            # Ramp-up / ramp-down waves: only commit the active layers' lanes.
            lane = lax.broadcasted_iota(jnp.int32, (Bp, LH), 1)
            mask = functools.reduce(
                jnp.logical_or,
                [(lane >= l * H) & (lane < (l + 1) * H) for l in active])
            ccat = jnp.where(mask, c_new, ccat)
            hcat = jnp.where(mask, h_new, hcat)

    h_last = hcat[:, (L - 1) * H:L * H]                     # lstm_out[:, -1, :]

    # Head: fc1 -> ReLU -> fc2 -> tanh * scale.
    # TODO(synk): nn.Dropout(0.1) and LSTM inter-layer dropout(0.2) are identity in eval.
    z = jnp.dot(h_last, sl("fc1w"), preferred_element_type=jnp.float32) + sl("fc1b")
    z = jnp.maximum(z, 0.0)
    if cfg.reduce_head:
        # output_size == 1: VPU multiply + lane reduce, no N=1 MXU matmul.
        y = jnp.sum(z * sl("fc2w"), axis=-1, keepdims=True) + sl("fc2b")
    else:
        y = jnp.dot(z, sl("fc2w"), preferred_element_type=jnp.float32) + sl("fc2b")
    out_ref[...] = jnp.tanh(y) * MAX_DAILY_CHANGE


# --------------------------------------------------------------------------
# One-time weight prep: scaling, gate-major reorder, fused RHS, single slab
# --------------------------------------------------------------------------
def _align8(n):
    return -(-n // 8) * 8


def prepare_params(params):
    layers = params["lstm"]
    L = len(layers)
    H = layers[0]["w_hh"].shape[1]
    Din = layers[0]["w_ih"].shape[1]
    G = 4 * H
    O = params["fc2_w"].shape[0]
    reduce_head = (O == 1)
    W = max(L * G, 128, O)

    # sigmoid(x) = 0.5*tanh(x/2)+0.5  ->  pre-scale i/f/o rows by 0.5.
    gate_scale = jnp.concatenate(
        [jnp.full((H,), 0.5), jnp.full((H,), 0.5),
         jnp.ones((H,)), jnp.full((H,), 0.5)]).astype(jnp.float32)

    def prep_w(w):   # (4H, Din_l) -> (Din_l, 4H), gate-scaled, f32
        return (w.astype(jnp.float32) * gate_scale[:, None]).T

    def prep_b(layer):  # -> (1, 4H)
        return ((layer["b_ih"] + layer["b_hh"]).astype(jnp.float32)
                * gate_scale).reshape(1, G)

    def to_gm(m, l):
        """Place standard i/f/g/o columns of layer l into gate-major
        (rows, L*4H) fused columns: gate k, layer l -> k*L*H + l*H."""
        out = jnp.zeros((m.shape[0], W), jnp.float32)
        for k in range(4):
            out = out.at[:, k * L * H + l * H:k * L * H + (l + 1) * H].set(
                m[:, k * H:(k + 1) * H])
        return out

    # Layer-0 input projection + all layers' biases (gate-major).
    wih0_gm = to_gm(prep_w(layers[0]["w_ih"]), 0)            # (Din, W)
    bias_gm = jnp.zeros((1, W), jnp.float32)
    for l, layer in enumerate(layers):
        bias_gm = bias_gm + to_gm(prep_b(layer), l)

    # Fused recurrence RHS: row block l holds W_hh of layer l (-> layer l's
    # gates) and W_ih of layer l+1 (-> layer l+1's gates).
    rhs = jnp.zeros((L * H, W), jnp.float32)
    for l, layer in enumerate(layers):
        rhs = rhs.at[l * H:(l + 1) * H, :].add(to_gm(prep_w(layer["w_hh"]), l))
        if l + 1 < L:
            rhs = rhs.at[l * H:(l + 1) * H, :].add(
                to_gm(prep_w(layers[l + 1]["w_ih"]), l + 1))

    fc1_w_t = jnp.transpose(params["fc1_w"]).astype(jnp.float32)   # (H, 32)
    fc1_b = params["fc1_b"].reshape(1, -1).astype(jnp.float32)
    if reduce_head:
        fc2_w = params["fc2_w"].astype(jnp.float32)                # (1, 32) row
    else:
        fc2_w = jnp.transpose(params["fc2_w"]).astype(jnp.float32)  # (32, O)
    fc2_b = params["fc2_b"].reshape(1, -1).astype(jnp.float32)

    # Pack everything into ONE slab (single weight DMA), 8-row aligned sections.
    items = [("wih0", wih0_gm), ("bias", bias_gm), ("rhs", rhs),
             ("fc1w", fc1_w_t), ("fc1b", fc1_b), ("fc2w", fc2_w),
             ("fc2b", fc2_b)]
    blocks, offsets, row = [], [], 0
    for name, arr in items:
        r, c = int(arr.shape[0]), int(arr.shape[1])
        offsets.append((name, row, r, c))
        rp = _align8(r)
        blk = jnp.zeros((rp, W), jnp.float32).at[:r, :c].set(arr)
        blocks.append(blk)
        row += rp
    slab = jnp.concatenate(blocks, axis=0)

    cfg = _Cfg(num_layers=L, hidden=H, input_size=Din, output_size=O,
               reduce_head=reduce_head, slab_width=W, offsets=tuple(offsets))
    return {"slab": slab, "cfg": cfg}


# --------------------------------------------------------------------------
# Forward wrapper
# --------------------------------------------------------------------------
@functools.partial(jax.jit, static_argnums=(1,))
def _forward(slab, cfg, x):
    B, T, Din = x.shape
    Bp = max(8, _align8(B))   # pad batch to a full sublane tile

    x_tm = jnp.transpose(x, (1, 0, 2)).astype(jnp.float32)      # (T, B, Din)
    if Bp != B:
        x_tm = jnp.pad(x_tm, ((0, 0), (0, Bp - B), (0, 0)))
    x_flat = x_tm.reshape(T * Bp, Din)       # pre-flattened: no in-kernel reshape

    kernel = functools.partial(_fused_kernel, cfg, T, Bp)
    # No grid: at these sizes the kernel is launch/serial-latency bound; a grid
    # or T-chunking would only add per-step overhead.  Total VMEM use is well
    # under 1 MiB, far below v7x's 64 MiB.
    out = pl.pallas_call(
        kernel,
        out_shape=jax.ShapeDtypeStruct((Bp, cfg.output_size), jnp.float32),
        in_specs=[_VMEM_SPEC, _VMEM_SPEC],
        out_specs=_VMEM_SPEC,
        scratch_shapes=[pltpu.VMEM((T * Bp, cfg.num_layers * 4 * cfg.hidden),
                                   jnp.float32)],
    )(x_flat, slab)
    return out[:B]


def stock_lstm_forward(prep, x):
    """x: (B, T, input_size), batch_first like the PyTorch module."""
    return _forward(prep["slab"], prep["cfg"], x)


# --------------------------------------------------------------------------
# Deterministic parameter init (matches PyTorch U(-1/sqrt(fan), 1/sqrt(fan)))
# --------------------------------------------------------------------------
def init_params(key, input_size, hidden_size, num_layers, output_size):
    def uniform(k, shape, bound):
        return jax.random.uniform(k, shape, jnp.float32, -bound, bound)

    params = {"lstm": []}
    klstm = 1.0 / jnp.sqrt(hidden_size)
    for layer in range(num_layers):
        d_in = input_size if layer == 0 else hidden_size
        key, k1, k2, k3, k4 = jax.random.split(key, 5)
        params["lstm"].append({
            "w_ih": uniform(k1, (4 * hidden_size, d_in), klstm),
            "w_hh": uniform(k2, (4 * hidden_size, hidden_size), klstm),
            "b_ih": uniform(k3, (4 * hidden_size,), klstm),
            "b_hh": uniform(k4, (4 * hidden_size,), klstm),
        })
    key, k1, k2, k3, k4 = jax.random.split(key, 5)
    k_fc1 = 1.0 / jnp.sqrt(hidden_size)
    k_fc2 = 1.0 / jnp.sqrt(32.0)
    params["fc1_w"] = uniform(k1, (32, hidden_size), k_fc1)
    params["fc1_b"] = uniform(k2, (32,), k_fc1)
    params["fc2_w"] = uniform(k3, (output_size, 32), k_fc2)
    params["fc2_b"] = uniform(k4, (output_size,), k_fc2)
    return params


# --------------------------------------------------------------------------
# Pure-JAX reference (for correctness check)
# --------------------------------------------------------------------------
def reference_forward(params, x):
    h_seq = jnp.transpose(x, (1, 0, 2)).astype(jnp.float32)   # (T, B, I)
    for layer in params["lstm"]:
        w_ih, w_hh = layer["w_ih"], layer["w_hh"]
        b = layer["b_ih"] + layer["b_hh"]
        H = w_hh.shape[1]
        B = h_seq.shape[1]
        h0 = jnp.zeros((B, H), jnp.float32)
        c0 = jnp.zeros((B, H), jnp.float32)

        def step(carry, xt):
            h, c = carry
            gates = xt @ w_ih.T + h @ w_hh.T + b
            i = jax.nn.sigmoid(gates[:, 0 * H:1 * H])
            f = jax.nn.sigmoid(gates[:, 1 * H:2 * H])
            g = jnp.tanh(gates[:, 2 * H:3 * H])
            o = jax.nn.sigmoid(gates[:, 3 * H:4 * H])
            c = f * c + i * g
            h = o * jnp.tanh(c)
            return (h, c), h

        (_, _), h_seq = lax.scan(step, (h0, c0), h_seq)
    h_last = h_seq[-1]
    z = jnp.maximum(h_last @ params["fc1_w"].T + params["fc1_b"], 0.0)
    y = z @ params["fc2_w"].T + params["fc2_b"]
    return jnp.tanh(y) * MAX_DAILY_CHANGE


# --------------------------------------------------------------------------
if __name__ == "__main__":
    INPUT_SIZE = 4
    HIDDEN_SIZE = 32
    NUM_LAYERS = 2
    OUTPUT_SIZE = 1
    BATCH = 2
    SEQ = 8

    key = jax.random.PRNGKey(0)
    key, pkey, xkey = jax.random.split(key, 3)
    params = init_params(pkey, INPUT_SIZE, HIDDEN_SIZE, NUM_LAYERS, OUTPUT_SIZE)
    prep = prepare_params(params)            # one-time weight prep, outside forward
    x = jax.random.normal(xkey, (BATCH, SEQ, INPUT_SIZE), jnp.float32)

    out = stock_lstm_forward(prep, x)
    out = jax.block_until_ready(out)

    ref = jax.block_until_ready(reference_forward(params, x))
    assert out.shape == (BATCH, OUTPUT_SIZE), out.shape
    assert jnp.allclose(out, ref, atol=1e-4, rtol=1e-4), (out, ref)

    print("KERNEL_OK")
</pallas_src>

<mosaic_0001>
module attributes {stable_mosaic.version = 11 : i64} {
  func.func @_fused_kernel(%arg0: memref<64x4xf32, #tpu.memory_space<vmem>>, %arg1: memref<136x256xf32, #tpu.memory_space<vmem>>, %arg2: memref<8x1xf32, #tpu.memory_space<vmem>>, %arg3: memref<64x256xf32, #tpu.memory_space<vmem>>) attributes {dimension_semantics = [], scalar_prefetch = 0 : i64, scratch_operands = 1 : i64, tpu.core_type = #tpu.core_type<tc>} {
    %c0 = arith.constant 0 : index
    %c0_0 = arith.constant 0 : index
    %0 = vector.load %arg0[%c0, %c0_0] : memref<64x4xf32, #tpu.memory_space<vmem>>, vector<64x4xf32>
    %c0_1 = arith.constant 0 : index
    %c0_2 = arith.constant 0 : index
    %1 = vector.load %arg1[%c0_1, %c0_2] : memref<136x256xf32, #tpu.memory_space<vmem>>, vector<4x256xf32>
    %cst = arith.constant dense<0.000000e+00> : vector<64x256xf32>
    %2 = tpu.matmul %0, %1, %cst {dimension_numbers = #tpu.dot_dimension_numbers<[1], [0], [0], [1], [0, 0, 1, 1], [], []>} : vector<64x4xf32>, vector<4x256xf32>, vector<64x256xf32> -> vector<64x256xf32>
    %c8 = arith.constant 8 : index
    %c0_3 = arith.constant 0 : index
    %3 = vector.load %arg1[%c8, %c0_3] : memref<136x256xf32, #tpu.memory_space<vmem>>, vector<1x256xf32>
    %4 = vector.broadcast %3 : vector<1x256xf32> to vector<64x256xf32>
    %5 = arith.addf %2, %4 : vector<64x256xf32>
    %c0_4 = arith.constant 0 : index
    %c0_5 = arith.constant 0 : index
    %6 = vector.load %arg3[%c0_4, %c0_5] : memref<64x256xf32, #tpu.memory_space<vmem>>, vector<64x256xf32>
    tpu.vector_store %arg3[%c0_4, %c0_5], %5 {strides = array<i32>} : memref<64x256xf32, #tpu.memory_space<vmem>>, vector<64x256xf32>,
    %c16 = arith.constant 16 : index
    %c0_6 = arith.constant 0 : index
    %7 = vector.load %arg1[%c16, %c0_6] : memref<136x256xf32, #tpu.memory_space<vmem>>, vector<64x256xf32>
    %cst_7 = arith.constant 0.000000e+00 : f32
    %8 = vector.broadcast %cst_7 : f32 to vector<8x64xf32>
    %cst_8 = arith.constant 0.000000e+00 : f32
    %9 = vector.broadcast %cst_8 : f32 to vector<8x64xf32>
    %c0_9 = arith.constant 0 : index
    %c0_10 = arith.constant 0 : index
    %10 = vector.load %arg3[%c0_9, %c0_10] : memref<64x256xf32, #tpu.memory_space<vmem>>, vector<8x256xf32>
    %cst_11 = arith.constant dense<0.000000e+00> : vector<8x256xf32>
    %11 = tpu.matmul %8, %7, %cst_11 {dimension_numbers = #tpu.dot_dimension_numbers<[1], [0], [0], [1], [0, 0, 1, 1], [], []>} : vector<8x64xf32>, vector<64x256xf32>, vector<8x256xf32> -> vector<8x256xf32>
    %12 = arith.addf %11, %10 : vector<8x256xf32>
    %13 = math.tanh %12 : vector<8x256xf32>
    %cst_12 = arith.constant 5.000000e-01 : f32
    %14 = vector.broadcast %cst_12 : f32 to vector<8x256xf32>
    %15 = arith.mulf %14, %13 : vector<8x256xf32>
    %cst_13 = arith.constant 5.000000e-01 : f32
    %16 = vector.broadcast %cst_13 : f32 to vector<8x256xf32>
    %17 = arith.addf %15, %16 : vector<8x256xf32>
    %18 = vector.extract_strided_slice %17 {offsets = [0, 0], sizes = [8, 64], strides = [1, 1]} : vector<8x256xf32> to vector<8x64xf32>
    %19 = vector.extract_strided_slice %17 {offsets = [0, 64], sizes = [8, 64], strides = [1, 1]} : vector<8x256xf32> to vector<8x64xf32>
    %20 = vector.extract_strided_slice %13 {offsets = [0, 128], sizes = [8, 64], strides = [1, 1]} : vector<8x256xf32> to vector<8x64xf32>
    %21 = vector.extract_strided_slice %17 {offsets = [0, 192], sizes = [8, 64], strides = [1, 1]} : vector<8x256xf32> to vector<8x64xf32>
    %22 = arith.mulf %19, %9 : vector<8x64xf32>
    %23 = arith.mulf %18, %20 : vector<8x64xf32>
    %24 = arith.addf %22, %23 : vector<8x64xf32>
    %25 = math.tanh %24 : vector<8x64xf32>
    %26 = arith.mulf %21, %25 : vector<8x64xf32>
    %27 = tpu.iota {dimensions = array<i32: 1>} : vector<8x64xi32>
    %c0_i32 = arith.constant 0 : i32
    %28 = vector.broadcast %c0_i32 : i32 to vector<8x64xi32>
    %29 = arith.cmpi sge, %27, %28 : vector<8x64xi32>
    %c32_i32 = arith.constant 32 : i32
    %30 = vector.broadcast %c32_i32 : i32 to vector<8x64xi32>
    %31 = arith.cmpi slt, %27, %30 : vector<8x64xi32>
    %32 = arith.andi %29, %31 : vector<8x64xi1>
    %33 = arith.select %32, %24, %9 : vector<8x64xi1>, vector<8x64xf32>
    %34 = arith.select %32, %26, %8 : vector<8x64xi1>, vector<8x64xf32>
    %c8_14 = arith.constant 8 : index
    %c0_15 = arith.constant 0 : index
    %35 = vector.load %arg3[%c8_14, %c0_15] : memref<64x256xf32, #tpu.memory_space<vmem>>, vector<8x256xf32>
    %cst_16 = arith.constant dense<0.000000e+00> : vector<8x256xf32>
    %36 = tpu.matmul %34, %7, %cst_16 {dimension_numbers = #tpu.dot_dimension_numbers<[1], [0], [0], [1], [0, 0, 1, 1], [], []>} : vector<8x64xf32>, vector<64x256xf32>, vector<8x256xf32> -> vector<8x256xf32>
    %37 = arith.addf %36, %35 : vector<8x256xf32>
    %38 = math.tanh %37 : vector<8x256xf32>
    %cst_17 = arith.constant 5.000000e-01 : f32
    %39 = vector.broadcast %cst_17 : f32 to vector<8x256xf32>
    %40 = arith.mulf %39, %38 : vector<8x256xf32>
    %cst_18 = arith.constant 5.000000e-01 : f32
    %41 = vector.broadcast %cst_18 : f32 to vector<8x256xf32>
    %42 = arith.addf %40, %41 : vector<8x256xf32>
    %43 = vector.extract_strided_slice %42 {offsets = [0, 0], sizes = [8, 64], strides = [1, 1]} : vector<8x256xf32> to vector<8x64xf32>
    %44 = vector.extract_strided_slice %42 {offsets = [0, 64], sizes = [8, 64], strides = [1, 1]} : vector<8x256xf32> to vector<8x64xf32>
    %45 = vector.extract_strided_slice %38 {offsets = [0, 128], sizes = [8, 64], strides = [1, 1]} : vector<8x256xf32> to vector<8x64xf32>
    %46 = vector.extract_strided_slice %42 {offsets = [0, 192], sizes = [8, 64], strides = [1, 1]} : vector<8x256xf32> to vector<8x64xf32>
    %47 = arith.mulf %44, %33 : vector<8x64xf32>
    %48 = arith.mulf %43, %45 : vector<8x64xf32>
    %49 = arith.addf %47, %48 : vector<8x64xf32>
    %50 = math.tanh %49 : vector<8x64xf32>
    %51 = arith.mulf %46, %50 : vector<8x64xf32>
    %c16_19 = arith.constant 16 : index
    %c0_20 = arith.constant 0 : index
    %52 = vector.load %arg3[%c16_19, %c0_20] : memref<64x256xf32, #tpu.memory_space<vmem>>, vector<8x256xf32>
    %cst_21 = arith.constant dense<0.000000e+00> : vector<8x256xf32>
    %53 = tpu.matmul %51, %7, %cst_21 {dimension_numbers = #tpu.dot_dimension_numbers<[1], [0], [0], [1], [0, 0, 1, 1], [], []>} : vector<8x64xf32>, vector<64x256xf32>, vector<8x256xf32> -> vector<8x256xf32>
    %54 = arith.addf %53, %52 : vector<8x256xf32>
    %55 = math.tanh %54 : vector<8x256xf32>
    %cst_22 = arith.constant 5.000000e-01 : f32
    %56 = vector.broadcast %cst_22 : f32 to vector<8x256xf32>
    %57 = arith.mulf %56, %55 : vector<8x256xf32>
    %cst_23 = arith.constant 5.000000e-01 : f32
    %58 = vector.broadcast %cst_23 : f32 to vector<8x256xf32>
    %59 = arith.addf %57, %58 : vector<8x256xf32>
    %60 = vector.extract_strided_slice %59 {offsets = [0, 0], sizes = [8, 64], strides = [1, 1]} : vector<8x256xf32> to vector<8x64xf32>
    %61 = vector.extract_strided_slice %59 {offsets = [0, 64], sizes = [8, 64], strides = [1, 1]} : vector<8x256xf32> to vector<8x64xf32>
    %62 = vector.extract_strided_slice %55 {offsets = [0, 128], sizes = [8, 64], strides = [1, 1]} : vector<8x256xf32> to vector<8x64xf32>
    %63 = vector.extract_strided_slice %59 {offsets = [0, 192], sizes = [8, 64], strides = [1, 1]} : vector<8x256xf32> to vector<8x64xf32>
    %64 = arith.mulf %61, %49 : vector<8x64xf32>
    %65 = arith.mulf %60, %62 : vector<8x64xf32>
    %66 = arith.addf %64, %65 : vector<8x64xf32>
    %67 = math.tanh %66 : vector<8x64xf32>
    %68 = arith.mulf %63, %67 : vector<8x64xf32>
    %c24 = arith.constant 24 : index
    %c0_24 = arith.constant 0 : index
    %69 = vector.load %arg3[%c24, %c0_24] : memref<64x256xf32, #tpu.memory_space<vmem>>, vector<8x256xf32>
    %cst_25 = arith.constant dense<0.000000e+00> : vector<8x256xf32>
    %70 = tpu.matmul %68, %7, %cst_25 {dimension_numbers = #tpu.dot_dimension_numbers<[1], [0], [0], [1], [0, 0, 1, 1], [], []>} : vector<8x64xf32>, vector<64x256xf32>, vector<8x256xf32> -> vector<8x256xf32>
    %71 = arith.addf %70, %69 : vector<8x256xf32>
    %72 = math.tanh %71 : vector<8x256xf32>
    %cst_26 = arith.constant 5.000000e-01 : f32
    %73 = vector.broadcast %cst_26 : f32 to vector<8x256xf32>
    %74 = arith.mulf %73, %72 : vector<8x256xf32>
    %cst_27 = arith.constant 5.000000e-01 : f32
    %75 = vector.broadcast %cst_27 : f32 to vector<8x256xf32>
    %76 = arith.addf %74, %75 : vector<8x256xf32>
    %77 = vector.extract_strided_slice %76 {offsets = [0, 0], sizes = [8, 64], strides = [1, 1]} : vector<8x256xf32> to vector<8x64xf32>
    %78 = vector.extract_strided_slice %76 {offsets = [0, 64], sizes = [8, 64], strides = [1, 1]} : vector<8x256xf32> to vector<8x64xf32>
    %79 = vector.extract_strided_slice %72 {offsets = [0, 128], sizes = [8, 64], strides = [1, 1]} : vector<8x256xf32> to vector<8x64xf32>
    %80 = vector.extract_strided_slice %76 {offsets = [0, 192], sizes = [8, 64], strides = [1, 1]} : vector<8x256xf32> to vector<8x64xf32>
    %81 = arith.mulf %78, %66 : vector<8x64xf32>
    %82 = arith.mulf %77, %79 : vector<8x64xf32>
    %83 = arith.addf %81, %82 : vector<8x64xf32>
    %84 = math.tanh %83 : vector<8x64xf32>
    %85 = arith.mulf %80, %84 : vector<8x64xf32>
    %c32 = arith.constant 32 : index
    %c0_28 = arith.constant 0 : index
    %86 = vector.load %arg3[%c32, %c0_28] : memref<64x256xf32, #tpu.memory_space<vmem>>, vector<8x256xf32>
    %cst_29 = arith.constant dense<0.000000e+00> : vector<8x256xf32>
    %87 = tpu.matmul %85, %7, %cst_29 {dimension_numbers = #tpu.dot_dimension_numbers<[1], [0], [0], [1], [0, 0, 1, 1], [], []>} : vector<8x64xf32>, vector<64x256xf32>, vector<8x256xf32> -> vector<8x256xf32>
    %88 = arith.addf %87, %86 : vector<8x256xf32>
    %89 = math.tanh %88 : vector<8x256xf32>
    %cst_30 = arith.constant 5.000000e-01 : f32
    %90 = vector.broadcast %cst_30 : f32 to vector<8x256xf32>
    %91 = arith.mulf %90, %89 : vector<8x256xf32>
    %cst_31 = arith.constant 5.000000e-01 : f32
    %92 = vector.broadcast %cst_31 : f32 to vector<8x256xf32>
    %93 = arith.addf %91, %92 : vector<8x256xf32>
    %94 = vector.extract_strided_slice %93 {offsets = [0, 0], sizes = [8, 64], strides = [1, 1]} : vector<8x256xf32> to vector<8x64xf32>
    %95 = vector.extract_strided_slice %93 {offsets = [0, 64], sizes = [8, 64], strides = [1, 1]} : vector<8x256xf32> to vector<8x64xf32>
    %96 = vector.extract_strided_slice %89 {offsets = [0, 128], sizes = [8, 64], strides = [1, 1]} : vector<8x256xf32> to vector<8x64xf32>
    %97 = vector.extract_strided_slice %93 {offsets = [0, 192], sizes = [8, 64], strides = [1, 1]} : vector<8x256xf32> to vector<8x64xf32>
    %98 = arith.mulf %95, %83 : vector<8x64xf32>
    %99 = arith.mulf %94, %96 : vector<8x64xf32>
    %100 = arith.addf %98, %99 : vector<8x64xf32>
    %101 = math.tanh %100 : vector<8x64xf32>
    %102 = arith.mulf %97, %101 : vector<8x64xf32>
    %c40 = arith.constant 40 : index
    %c0_32 = arith.constant 0 : index
    %103 = vector.load %arg3[%c40, %c0_32] : memref<64x256xf32, #tpu.memory_space<vmem>>, vector<8x256xf32>
    %cst_33 = arith.constant dense<0.000000e+00> : vector<8x256xf32>
    %104 = tpu.matmul %102, %7, %cst_33 {dimension_numbers = #tpu.dot_dimension_numbers<[1], [0], [0], [1], [0, 0, 1, 1], [], []>} : vector<8x64xf32>, vector<64x256xf32>, vector<8x256xf32> -> vector<8x256xf32>
    %105 = arith.addf %104, %103 : vector<8x256xf32>
    %106 = math.tanh %105 : vector<8x256xf32>
    %cst_34 = arith.constant 5.000000e-01 : f32
    %107 = vector.broadcast %cst_34 : f32 to vector<8x256xf32>
    %108 = arith.mulf %107, %106 : vector<8x256xf32>
    %cst_35 = arith.constant 5.000000e-01 : f32
    %109 = vector.broadcast %cst_35 : f32 to vector<8x256xf32>
    %110 = arith.addf %108, %109 : vector<8x256xf32>
    %111 = vector.extract_strided_slice %110 {offsets = [0, 0], sizes = [8, 64], strides = [1, 1]} : vector<8x256xf32> to vector<8x64xf32>
    %112 = vector.extract_strided_slice %110 {offsets = [0, 64], sizes = [8, 64], strides = [1, 1]} : vector<8x256xf32> to vector<8x64xf32>
    %113 = vector.extract_strided_slice %106 {offsets = [0, 128], sizes = [8, 64], strides = [1, 1]} : vector<8x256xf32> to vector<8x64xf32>
    %114 = vector.extract_strided_slice %110 {offsets = [0, 192], sizes = [8, 64], strides = [1, 1]} : vector<8x256xf32> to vector<8x64xf32>
    %115 = arith.mulf %112, %100 : vector<8x64xf32>
    %116 = arith.mulf %111, %113 : vector<8x64xf32>
    %117 = arith.addf %115, %116 : vector<8x64xf32>
    %118 = math.tanh %117 : vector<8x64xf32>
    %119 = arith.mulf %114, %118 : vector<8x64xf32>
    %c48 = arith.constant 48 : index
    %c0_36 = arith.constant 0 : index
    %120 = vector.load %arg3[%c48, %c0_36] : memref<64x256xf32, #tpu.memory_space<vmem>>, vector<8x256xf32>
    %cst_37 = arith.constant dense<0.000000e+00> : vector<8x256xf32>
    %121 = tpu.matmul %119, %7, %cst_37 {dimension_numbers = #tpu.dot_dimension_numbers<[1], [0], [0], [1], [0, 0, 1, 1], [], []>} : vector<8x64xf32>, vector<64x256xf32>, vector<8x256xf32> -> vector<8x256xf32>
    %122 = arith.addf %121, %120 : vector<8x256xf32>
    %123 = math.tanh %122 : vector<8x256xf32>
    %cst_38 = arith.constant 5.000000e-01 : f32
    %124 = vector.broadcast %cst_38 : f32 to vector<8x256xf32>
    %125 = arith.mulf %124, %123 : vector<8x256xf32>
    %cst_39 = arith.constant 5.000000e-01 : f32
    %126 = vector.broadcast %cst_39 : f32 to vector<8x256xf32>
    %127 = arith.addf %125, %126 : vector<8x256xf32>
    %128 = vector.extract_strided_slice %127 {offsets = [0, 0], sizes = [8, 64], strides = [1, 1]} : vector<8x256xf32> to vector<8x64xf32>
    %129 = vector.extract_strided_slice %127 {offsets = [0, 64], sizes = [8, 64], strides = [1, 1]} : vector<8x256xf32> to vector<8x64xf32>
    %130 = vector.extract_strided_slice %123 {offsets = [0, 128], sizes = [8, 64], strides = [1, 1]} : vector<8x256xf32> to vector<8x64xf32>
    %131 = vector.extract_strided_slice %127 {offsets = [0, 192], sizes = [8, 64], strides = [1, 1]} : vector<8x256xf32> to vector<8x64xf32>
    %132 = arith.mulf %129, %117 : vector<8x64xf32>
    %133 = arith.mulf %128, %130 : vector<8x64xf32>
    %134 = arith.addf %132, %133 : vector<8x64xf32>
    %135 = math.tanh %134 : vector<8x64xf32>
    %136 = arith.mulf %131, %135 : vector<8x64xf32>
    %c56 = arith.constant 56 : index
    %c0_40 = arith.constant 0 : index
    %137 = vector.load %arg3[%c56, %c0_40] : memref<64x256xf32, #tpu.memory_space<vmem>>, vector<8x256xf32>
    %cst_41 = arith.constant dense<0.000000e+00> : vector<8x256xf32>
    %138 = tpu.matmul %136, %7, %cst_41 {dimension_numbers = #tpu.dot_dimension_numbers<[1], [0], [0], [1], [0, 0, 1, 1], [], []>} : vector<8x64xf32>, vector<64x256xf32>, vector<8x256xf32> -> vector<8x256xf32>
    %139 = arith.addf %138, %137 : vector<8x256xf32>
    %140 = math.tanh %139 : vector<8x256xf32>
    %cst_42 = arith.constant 5.000000e-01 : f32
    %141 = vector.broadcast %cst_42 : f32 to vector<8x256xf32>
    %142 = arith.mulf %141, %140 : vector<8x256xf32>
    %cst_43 = arith.constant 5.000000e-01 : f32
    %143 = vector.broadcast %cst_43 : f32 to vector<8x256xf32>
    %144 = arith.addf %142, %143 : vector<8x256xf32>
    %145 = vector.extract_strided_slice %144 {offsets = [0, 0], sizes = [8, 64], strides = [1, 1]} : vector<8x256xf32> to vector<8x64xf32>
    %146 = vector.extract_strided_slice %144 {offsets = [0, 64], sizes = [8, 64], strides = [1, 1]} : vector<8x256xf32> to vector<8x64xf32>
    %147 = vector.extract_strided_slice %140 {offsets = [0, 128], sizes = [8, 64], strides = [1, 1]} : vector<8x256xf32> to vector<8x64xf32>
    %148 = vector.extract_strided_slice %144 {offsets = [0, 192], sizes = [8, 64], strides = [1, 1]} : vector<8x256xf32> to vector<8x64xf32>
    %149 = arith.mulf %146, %134 : vector<8x64xf32>
    %150 = arith.mulf %145, %147 : vector<8x64xf32>
    %151 = arith.addf %149, %150 : vector<8x64xf32>
    %152 = math.tanh %151 : vector<8x64xf32>
    %153 = arith.mulf %148, %152 : vector<8x64xf32>
    %c56_44 = arith.constant 56 : index
    %c0_45 = arith.constant 0 : index
    %154 = vector.load %arg3[%c56_44, %c0_45] : memref<64x256xf32, #tpu.memory_space<vmem>>, vector<8x256xf32>
    %cst_46 = arith.constant dense<0.000000e+00> : vector<8x256xf32>
    %155 = tpu.matmul %153, %7, %cst_46 {dimension_numbers = #tpu.dot_dimension_numbers<[1], [0], [0], [1], [0, 0, 1, 1], [], []>} : vector<8x64xf32>, vector<64x256xf32>, vector<8x256xf32> -> vector<8x256xf32>
    %156 = arith.addf %155, %154 : vector<8x256xf32>
    %157 = math.tanh %156 : vector<8x256xf32>
    %cst_47 = arith.constant 5.000000e-01 : f32
    %158 = vector.broadcast %cst_47 : f32 to vector<8x256xf32>
    %159 = arith.mulf %158, %157 : vector<8x256xf32>
    %cst_48 = arith.constant 5.000000e-01 : f32
    %160 = vector.broadcast %cst_48 : f32 to vector<8x256xf32>
    %161 = arith.addf %159, %160 : vector<8x256xf32>
    %162 = vector.extract_strided_slice %161 {offsets = [0, 0], sizes = [8, 64], strides = [1, 1]} : vector<8x256xf32> to vector<8x64xf32>
    %163 = vector.extract_strided_slice %161 {offsets = [0, 64], sizes = [8, 64], strides = [1, 1]} : vector<8x256xf32> to vector<8x64xf32>
    %164 = vector.extract_strided_slice %157 {offsets = [0, 128], sizes = [8, 64], strides = [1, 1]} : vector<8x256xf32> to vector<8x64xf32>
    %165 = vector.extract_strided_slice %161 {offsets = [0, 192], sizes = [8, 64], strides = [1, 1]} : vector<8x256xf32> to vector<8x64xf32>
    %166 = arith.mulf %163, %151 : vector<8x64xf32>
    %167 = arith.mulf %162, %164 : vector<8x64xf32>
    %168 = arith.addf %166, %167 : vector<8x64xf32>
    %169 = math.tanh %168 : vector<8x64xf32>
    %170 = arith.mulf %165, %169 : vector<8x64xf32>
    %171 = tpu.iota {dimensions = array<i32: 1>} : vector<8x64xi32>
    %c32_i32_49 = arith.constant 32 : i32
    %172 = vector.broadcast %c32_i32_49 : i32 to vector<8x64xi32>
    %173 = arith.cmpi sge, %171, %172 : vector<8x64xi32>
    %c64_i32 = arith.constant 64 : i32
    %174 = vector.broadcast %c64_i32 : i32 to vector<8x64xi32>
    %175 = arith.cmpi slt, %171, %174 : vector<8x64xi32>
    %176 = arith.andi %173, %175 : vector<8x64xi1>
    %177 = arith.select %176, %170, %153 : vector<8x64xi1>, vector<8x64xf32>
    %178 = vector.extract_strided_slice %177 {offsets = [0, 32], sizes = [8, 32], strides = [1, 1]} : vector<8x64xf32> to vector<8x32xf32>
    %c80 = arith.constant 80 : index
    %c0_50 = arith.constant 0 : index
    %179 = vector.load %arg1[%c80, %c0_50] : memref<136x256xf32, #tpu.memory_space<vmem>>, vector<32x32xf32>
    %cst_51 = arith.constant dense<0.000000e+00> : vector<8x32xf32>
    %180 = tpu.matmul %178, %179, %cst_51 {dimension_numbers = #tpu.dot_dimension_numbers<[1], [0], [0], [1], [0, 0, 1, 1], [], []>} : vector<8x32xf32>, vector<32x32xf32>, vector<8x32xf32> -> vector<8x32xf32>
    %c112 = arith.constant 112 : index
    %c0_52 = arith.constant 0 : index
    %181 = vector.load %arg1[%c112, %c0_52] : memref<136x256xf32, #tpu.memory_space<vmem>>, vector<1x32xf32>
    %182 = vector.broadcast %181 : vector<1x32xf32> to vector<8x32xf32>
    %183 = arith.addf %180, %182 : vector<8x32xf32>
    %cst_53 = arith.constant 0.000000e+00 : f32
    %184 = vector.broadcast %cst_53 : f32 to vector<8x32xf32>
    %185 = arith.maximumf %183, %184 : vector<8x32xf32>
    %c120 = arith.constant 120 : index
    %c0_54 = arith.constant 0 : index
    %186 = vector.load %arg1[%c120, %c0_54] : memref<136x256xf32, #tpu.memory_space<vmem>>, vector<1x32xf32>
    %187 = vector.broadcast %186 : vector<1x32xf32> to vector<8x32xf32>
    %188 = arith.mulf %185, %187 : vector<8x32xf32>
    %cst_55 = arith.constant dense<0.000000e+00> : vector<8xf32>
    %189 = vector.multi_reduction <add>, %188, %cst_55 [1] : vector<8x32xf32> to vector<8xf32>
    %190 = vector.shape_cast %189 : vector<8xf32> to vector<8x1xf32>
    %c128 = arith.constant 128 : index
    %c0_56 = arith.constant 0 : index
    %191 = vector.load %arg1[%c128, %c0_56] : memref<136x256xf32, #tpu.memory_space<vmem>>, vector<1x1xf32>
    %192 = vector.broadcast %191 : vector<1x1xf32> to vector<8x1xf32>
    %193 = arith.addf %190, %192 : vector<8x1xf32>
    %194 = math.tanh %193 : vector<8x1xf32>
    %cst_57 = arith.constant 3.000000e-02 : f32
    %195 = vector.broadcast %cst_57 : f32 to vector<8x1xf32>
    %196 = arith.mulf %194, %195 : vector<8x1xf32>
    %c0_58 = arith.constant 0 : index
    %c0_59 = arith.constant 0 : index
    %197 = vector.load %arg2[%c0_58, %c0_59] : memref<8x1xf32, #tpu.memory_space<vmem>>, vector<8x1xf32>
    tpu.vector_store %arg2[%c0_58, %c0_59], %196 {strides = array<i32>} : memref<8x1xf32, #tpu.memory_space<vmem>>, vector<8x1xf32>,
    return
  }
}

</mosaic_0001>

<llo_original>
// kernel: _forward.1
$region0: #{_forward.1}
  #allocation0 [shape = 'u32[]', space=smem, size = 0x4, offset = 0x4, fixed_abs, tag = 'smem constant byte address 0x4 - core index']
  #allocation1 [shape = 'u32[144,128]{1,0:T(1,128)}', space=vmem, size = 0x12000, scoped, tag = 'internal scratch']
  #allocation2 [shape = 'f32[64,256]{1,0:T(8,128)}', space=vmem, size = 0x10000, scoped, tag = 'scratch operand']
  %s0 = inlined_call_operand.vmem [shape: f32[64,4], index: 0, kind: input, shape index: {}]
  %s1 = inlined_call_operand.hbm [shape: f32[136,256], index: 1, kind: input, shape index: {}]
  %s2 = inlined_call_operand.vmem [shape: f32[8,1], index: 2, kind: output, shape index: {}]
  %s3 = sld [smem:[#allocation0]]
  $region22: #{_forward.1} parent=0
    _
  %s5 = ssub.s32 1, %s3
  %s6 = scalar_select 0, %s5, %s3
  $region1: #{_forward.1} parent=0
    #allocation3 [shape = 'u8[139264]{0}', space=vmem, size = 0x22000, scoped, tag = 'input window, operand 1, single buffered']
    #allocation4 [shape = 's32[1]{0}', space=sflag, size = 0x4, scoped, tag = 'scoped memory for _forward.1']
    %7 = vsyncpa [#allocation4], 0
    // Predicated region
    $region2: #{_forward.1} parent=1 // pred_check
      _
    $region3: #{_forward.1} parent=1 // pred_check_branch
      %9 = sbr.rel (0) target = $region5
    $region4: #{_forward.1} parent=1 // pred_region
      _
    $region5: #{_forward.1} parent=1 // pred_fallthru
      _
    // Predicated region
    $region6: #{_forward.1} parent=1 // pred_check
      _
    $region7: #{_forward.1} parent=1 // pred_check_branch
      %11 = sbr.rel (0) target = $region9
    $region8: #{_forward.1} parent=1 // pred_region
      %s13 = ssub.s32 4352, 4352
      %14 = vsyncadd [#allocation4], %s13
      %s15 = sshll.u32 [#allocation3], 4
      %s16 = int_to_ptr.vmem [resolvable:$true] %s15
      %21 = dma.hbm_to_vmem [thread:$0]  %s1, 4352, %s16, [#allocation4], 256, 256, 16
    $region9: #{_forward.1} parent=1 // pred_fallthru
      _
    // Predicated region
    $region10: #{_forward.1} parent=1 // pred_check
      _
    $region11: #{_forward.1} parent=1 // pred_check_branch
      %23 = sbr.rel (0) target = $region13
    $region12: #{_forward.1} parent=1 // pred_region
      %24 = dma.done [#allocation4], 4352
    $region13: #{_forward.1} parent=1 // pred_fallthru
      _
    %v25 = vld [vmem:[%s0] sm:$0xff]
    %v26 = vld [vmem:[%s0 + $0x8] sm:$0xff]
    %v27 = vld [vmem:[%s0 + $0x10] sm:$0xff]
    %v28 = vld [vmem:[%s0 + $0x18] sm:$0xff]
    %v29 = vld [vmem:[%s0 + $0x20] sm:$0xff]
    %v30 = vld [vmem:[%s0 + $0x28] sm:$0xff]
    %v31 = vld [vmem:[%s0 + $0x30] sm:$0xff]
    %v32 = vld [vmem:[%s0 + $0x38] sm:$0xff]
    %v33 = vld [vmem:[#allocation3] sm:$0xf]
    %v34 = vld [vmem:[#allocation3 + $0x8] sm:$0xf]
    %s35 = scalar_lea.vmem [#allocation3], 16
    %v36 = vld [vmem:[%s35] ss:$8 sm:$0x3]
    %v38 = vlaneseq
    %v39 = vshrl.u32 %v38, 7
    %v40 = vsub.s32 0, %v39
    %v41 = vrot.slane %v36, %v40
    %v42 = vlaneseq
    %v43 = vshrl.u32 %v42, 7
    %v44 = vsub.s32 1, %v43
    %v45 = vrot.slane %v36, %v44
    %vm48 = vcmask 31744
    %v50 = vsel %vm48, %v25, 0
    %v53 = vsel %vm48, %v26, 0
    %v56 = vsel %vm48, %v27, 0
    %v59 = vsel %vm48, %v28, 0
    %v62 = vsel %vm48, %v29, 0
    %v65 = vsel %vm48, %v30, 0
    %v68 = vsel %vm48, %v31, 0
    %v71 = vsel %vm48, %v32, 0
    %vm73 = vcmask 1043456
    %v75 = vsel %vm73, %v33, 0
    %v78 = vsel %vm73, %v34, 0
    %80 = vmatprep.subr.mxu0 0.0
    %81 = vmatpush1.msra.mxu0 0.0
    %82 = vmatprep.subr.mxu0 0.0
    %83 = vmatpush1.msra.mxu0 0.0
    %84 = vmatprep.subr.mxu0 0.0
    %85 = vmatpush1.msra.mxu0 0.0
    %86 = vmatprep.subr.mxu0 0.0
    %87 = vmatpush1.msra.mxu0 0.0
    %88 = vmatprep.subr.mxu0 0.0
    %89 = vmatpush1.msra.mxu0 0.0
    %90 = vmatprep.subr.mxu0 0.0
    %91 = vmatpush1.msra.mxu0 0.0
    %92 = vmatprep.subr.mxu0 0.0
    %93 = vmatpush1.msra.mxu0 0.0
    %94 = vmatprep.subr.mxu0 0.0
    %95 = vmatpush1.msra.mxu0 0.0
    %96 = vmatprep.subr.mxu0 0.0
    %97 = vmatpush1.msra.mxu0 0.0
    %98 = vmatprep.subr.mxu0 0.0
    %99 = vmatpush1.msra.mxu0 0.0
    %100 = vmatprep.subr.mxu0 0.0
    %101 = vmatpush1.msra.mxu0 0.0
    %102 = vmatprep.subr.mxu0 0.0
    %103 = vmatpush1.msra.mxu0 0.0
    %104 = vmatprep.subr.mxu0 0.0
    %105 = vmatpush1.msra.mxu0 0.0
    %106 = vmatprep.subr.mxu0 0.0
    %107 = vmatpush1.msra.mxu0 0.0
    %108 = vmatprep.subr.mxu0 0.0
    %109 = vmatpush1.msra.mxu0 0.0
    %110 = vmatprep.subr.mxu0 %v78
    %111 = vmatpush1.msra.mxu0 %v75
    %112 = vmatprep.subr.mxu0 0.0
    %113 = vmatpush2.msra.mxu0 0.0
    %114 = vmatprep.subr.mxu0 0.0
    %115 = vmatpush2.msra.mxu0 0.0
    %116 = vmatprep.subr.mxu0 0.0
    %117 = vmatpush2.msra.mxu0 0.0
    %118 = vmatprep.subr.mxu0 0.0
    %119 = vmatpush2.msra.mxu0 0.0
    %120 = vmatprep.subr.mxu0 0.0
    %121 = vmatpush2.msra.mxu0 0.0
    %122 = vmatprep.subr.mxu0 0.0
    %123 = vmatpush2.msra.mxu0 0.0
    %124 = vmatprep.subr.mxu0 0.0
    %125 = vmatpush2.msra.mxu0 0.0
    %126 = vmatprep.subr.mxu0 0.0
    %127 = vmatpush2.msra.mxu0 0.0
    %128 = vmatprep.subr.mxu0 0.0
    %129 = vmatpush2.msra.mxu0 0.0
    %130 = vmatprep.subr.mxu0 0.0
    %131 = vmatpush2.msra.mxu0 0.0
    %132 = vmatprep.subr.mxu0 0.0
    %133 = vmatpush2.msra.mxu0 0.0
    %134 = vmatprep.subr.mxu0 0.0
    %135 = vmatpush2.msra.mxu0 0.0
    %136 = vmatprep.subr.mxu0 0.0
    %137 = vmatpush2.msra.mxu0 0.0
    %138 = vmatprep.subr.mxu0 0.0
    %139 = vmatpush2.msra.mxu0 0.0
    %140 = vmatprep.subr.mxu0 0.0
    %141 = vmatpush2.msra.mxu0 0.0
    %142 = vmatprep.subr.mxu0 0.0
    %143 = vmatpush2.msra.mxu0 0.0
    %144 = vmatprep.mubr.f32.mxu0 0.0
    %145 = vmatmul.mubr.f32.gmra.mxu0 %v50
    %v146 = vpop.f32.mrf.mxu0
    %v147 = vadd.f32 %v41, %v146
    %v148 = vpop.f32.mrf.mxu0
    %v149 = vadd.f32 %v45, %v148
    %150 = vmatprep.mubr.f32.mxu0 0.0
    %151 = vmatmul.mubr.f32.gmra.mxu0 %v53
    %v152 = vpop.f32.mrf.mxu0
    %v153 = vadd.f32 %v41, %v152
    %v154 = vpop.f32.mrf.mxu0
    %v155 = vadd.f32 %v45, %v154
    %156 = vmatprep.mubr.f32.mxu0 0.0
    %157 = vmatmul.mubr.f32.gmra.mxu0 %v56
    %v158 = vpop.f32.mrf.mxu0
    %v159 = vadd.f32 %v41, %v158
    %v160 = vpop.f32.mrf.mxu0
    %v161 = vadd.f32 %v45, %v160
    %162 = vmatprep.mubr.f32.mxu0 0.0
    %163 = vmatmul.mubr.f32.gmra.mxu0 %v59
    %v164 = vpop.f32.mrf.mxu0
    %v165 = vadd.f32 %v41, %v164
    %v166 = vpop.f32.mrf.mxu0
    %v167 = vadd.f32 %v45, %v166
    %168 = vmatprep.mubr.f32.mxu0 0.0
    %169 = vmatmul.mubr.f32.gmra.mxu0 %v62
    %v170 = vpop.f32.mrf.mxu0
    %v171 = vadd.f32 %v41, %v170
    %v172 = vpop.f32.mrf.mxu0
    %v173 = vadd.f32 %v45, %v172
    %174 = vmatprep.mubr.f32.mxu0 0.0
    %175 = vmatmul.mubr.f32.gmra.mxu0 %v65
    %v176 = vpop.f32.mrf.mxu0
    %v177 = vadd.f32 %v41, %v176
    %v178 = vpop.f32.mrf.mxu0
    %v179 = vadd.f32 %v45, %v178
    %180 = vmatprep.mubr.f32.mxu0 0.0
    %181 = vmatmul.mubr.f32.gmra.mxu0 %v68
    %v182 = vpop.f32.mrf.mxu0
    %v183 = vadd.f32 %v41, %v182
    %v184 = vpop.f32.mrf.mxu0
    %v185 = vadd.f32 %v45, %v184
    %186 = vmatprep.mubr.f32.mxu0 0.0
    %187 = vmatmul.mubr.f32.gmra.mxu0 %v71
    %v188 = vpop.f32.mrf.mxu0
    %v189 = vadd.f32 %v41, %v188
    %v190 = vpop.f32.mrf.mxu0
    %v191 = vadd.f32 %v45, %v190
    %192 = vdwg.mxu0
    %193 = vst [vmem:[#allocation2] sm:$0xff] %v147
    %194 = vst [vmem:[#allocation2 + $0x8] sm:$0xff] %v149
    %195 = vst [vmem:[#allocation2 + $0x10] sm:$0xff] %v153
    %196 = vst [vmem:[#allocation2 + $0x18] sm:$0xff] %v155
    %197 = vst [vmem:[#allocation2 + $0x20] sm:$0xff] %v159
    %198 = vst [vmem:[#allocation2 + $0x28] sm:$0xff] %v161
    %199 = vst [vmem:[#allocation2 + $0x30] sm:$0xff] %v165
    %200 = vst [vmem:[#allocation2 + $0x38] sm:$0xff] %v167
    %201 = vst [vmem:[#allocation2 + $0x40] sm:$0xff] %v171
    %202 = vst [vmem:[#allocation2 + $0x48] sm:$0xff] %v173
    %203 = vst [vmem:[#allocation2 + $0x50] sm:$0xff] %v177
    %204 = vst [vmem:[#allocation2 + $0x58] sm:$0xff] %v179
    %205 = vst [vmem:[#allocation2 + $0x60] sm:$0xff] %v183
    %206 = vst [vmem:[#allocation2 + $0x68] sm:$0xff] %v185
    %207 = vst [vmem:[#allocation2 + $0x70] sm:$0xff] %v189
    %208 = vst [vmem:[#allocation2 + $0x78] sm:$0xff] %v191
    %v209 = vld [vmem:[#allocation3 + $0x20] sm:$0xff]
    %v210 = vld [vmem:[#allocation3 + $0x28] sm:$0xff]
    %v211 = vld [vmem:[#allocation3 + $0x30] sm:$0xff]
    %v212 = vld [vmem:[#allocation3 + $0x38] sm:$0xff]
    %v213 = vld [vmem:[#allocation3 + $0x40] sm:$0xff]
    %v214 = vld [vmem:[#allocation3 + $0x48] sm:$0xff]
    %v215 = vld [vmem:[#allocation3 + $0x50] sm:$0xff]
    %v216 = vld [vmem:[#allocation3 + $0x58] sm:$0xff]
    %v217 = vld [vmem:[#allocation3 + $0x60] sm:$0xff]
    %v218 = vld [vmem:[#allocation3 + $0x68] sm:$0xff]
    %v219 = vld [vmem:[#allocation3 + $0x70] sm:$0xff]
    %v220 = vld [vmem:[#allocation3 + $0x78] sm:$0xff]
    %v221 = vld [vmem:[#allocation3 + $0x80] sm:$0xff]
    %v222 = vld [vmem:[#allocation3 + $0x88] sm:$0xff]
    %v223 = vld [vmem:[#allocation3 + $0x90] sm:$0xff]
    %v224 = vld [vmem:[#allocation3 + $0x98] sm:$0xff]
    %v225 = vld [vmem:[#allocation2] sm:$0xff]
    %v226 = vld [vmem:[#allocation2 + $0x8] sm:$0xff]
    %vm227 = vcmask 523264
    %v229 = vsel %vm227, 0.0, 0
    %231 = vmatprep.subr.mxu0 0.0
    %232 = vmatpush1.msra.mxu0 0.0
    %233 = vmatprep.subr.mxu0 0.0
    %234 = vmatpush1.msra.mxu0 0.0
    %235 = vmatprep.subr.mxu0 0.0
    %236 = vmatpush1.msra.mxu0 0.0
    %237 = vmatprep.subr.mxu0 0.0
    %238 = vmatpush1.msra.mxu0 0.0
    %239 = vmatprep.subr.mxu0 0.0
    %240 = vmatpush1.msra.mxu0 0.0
    %241 = vmatprep.subr.mxu0 0.0
    %242 = vmatpush1.msra.mxu0 0.0
    %243 = vmatprep.subr.mxu0 0.0
    %244 = vmatpush1.msra.mxu0 0.0
    %245 = vmatprep.subr.mxu0 0.0
    %246 = vmatpush1.msra.mxu0 0.0
    %247 = vmatprep.subr.mxu0 %v224
    %248 = vmatpush1.msra.mxu0 %v223
    %249 = vmatprep.subr.mxu0 %v222
    %250 = vmatpush1.msra.mxu0 %v221
    %251 = vmatprep.subr.mxu0 %v220
    %252 = vmatpush1.msra.mxu0 %v219
    %253 = vmatprep.subr.mxu0 %v218
    %254 = vmatpush1.msra.mxu0 %v217
    %255 = vmatprep.subr.mxu0 %v216
    %256 = vmatpush1.msra.mxu0 %v215
    %257 = vmatprep.subr.mxu0 %v214
    %258 = vmatpush1.msra.mxu0 %v213
    %259 = vmatprep.subr.mxu0 %v212
    %260 = vmatpush1.msra.mxu0 %v211
    %261 = vmatprep.subr.mxu0 %v210
    %262 = vmatpush1.msra.mxu0 %v209
    %263 = vmatprep.subr.mxu0 0.0
    %264 = vmatpush2.msra.mxu0 0.0
    %265 = vmatprep.subr.mxu0 0.0
    %266 = vmatpush2.msra.mxu0 0.0
    %267 = vmatprep.subr.mxu0 0.0
    %268 = vmatpush2.msra.mxu0 0.0
    %269 = vmatprep.subr.mxu0 0.0
    %270 = vmatpush2.msra.mxu0 0.0
    %271 = vmatprep.subr.mxu0 0.0
    %272 = vmatpush2.msra.mxu0 0.0
    %273 = vmatprep.subr.mxu0 0.0
    %274 = vmatpush2.msra.mxu0 0.0
    %275 = vmatprep.subr.mxu0 0.0
    %276 = vmatpush2.msra.mxu0 0.0
    %277 = vmatprep.subr.mxu0 0.0
    %278 = vmatpush2.msra.mxu0 0.0
    %279 = vmatprep.subr.mxu0 0.0
    %280 = vmatpush2.msra.mxu0 0.0
    %281 = vmatprep.subr.mxu0 0.0
    %282 = vmatpush2.msra.mxu0 0.0
    %283 = vmatprep.subr.mxu0 0.0
    %284 = vmatpush2.msra.mxu0 0.0
    %285 = vmatprep.subr.mxu0 0.0
    %286 = vmatpush2.msra.mxu0 0.0
    %287 = vmatprep.subr.mxu0 0.0
    %288 = vmatpush2.msra.mxu0 0.0
    %289 = vmatprep.subr.mxu0 0.0
    %290 = vmatpush2.msra.mxu0 0.0
    %291 = vmatprep.subr.mxu0 0.0
    %292 = vmatpush2.msra.mxu0 0.0
    %293 = vmatprep.subr.mxu0 0.0
    %294 = vmatpush2.msra.mxu0 0.0
    %295 = vmatprep.mubr.f32.mxu0 0.0
    %296 = vmatmul.mubr.f32.gmra.mxu0 %v229
    %v297 = vpop.f32.mrf.mxu0
    %v298 = vadd.f32 %v225, %v297
    %v299 = vpop.f32.mrf.mxu0
    %v300 = vadd.f32 %v226, %v299
    %301 = vdwg.mxu0
    %v302 = vtanh.pop %v298
    %v303 = vtanh.pop %v300
    %v304 = vmul.f32 %v302, 0.5
    %v305 = vmul.f32 %v303, 0.5
    %v306 = vadd.f32 %v304, 0.5
    %v307 = vadd.f32 %v305, 0.5
    %v308 = vmul.f32 %v306, 0.0
    %v309 = vmul.f32 %v306, %v303
    %311 = vrot.lane.b32.xlu0 %v309, 64
    %v312 = vpop.permute.xlu0 %311
    %v314 = vadd.f32 %v308, %v312
    %v315 = vtanh.pop %v314
    %v316 = vmul.f32 %v307, %v315
    %v317 = vlaneseq
    %v318 = vand.u32 %v317, 127
    %vm319 = vcmp.ge.s32.totalorder %v318, 0
    %vm320 = vcmp.lt.s32.totalorder %v318, 32
    %vm321 = vmand %vm319, %vm320
    %323 = vrot.lane.b32.xlu0 %v314, 64
    %v324 = vpop.permute.xlu0 %323
    %v326 = vsel %vm321, %v324, 0.0
    %328 = vrot.lane.b32.xlu0 %v316, 64
    %v329 = vpop.permute.xlu0 %328
    %v331 = vsel %vm321, %v329, 0.0
    %v332 = vld [vmem:[#allocation2 + $0x10] sm:$0xff]
    %v333 = vld [vmem:[#allocation2 + $0x18] sm:$0xff]
    %v335 = vsel %vm227, %v331, 0
    %337 = vmatprep.subr.mxu0 0.0
    %338 = vmatpush1.msra.mxu0 0.0
    %339 = vmatprep.subr.mxu0 0.0
    %340 = vmatpush1.msra.mxu0 0.0
    %341 = vmatprep.subr.mxu0 0.0
    %342 = vmatpush1.msra.mxu0 0.0
    %343 = vmatprep.subr.mxu0 0.0
    %344 = vmatpush1.msra.mxu0 0.0
    %345 = vmatprep.subr.mxu0 0.0
    %346 = vmatpush1.msra.mxu0 0.0
    %347 = vmatprep.subr.mxu0 0.0
    %348 = vmatpush1.msra.mxu0 0.0
    %349 = vmatprep.subr.mxu0 0.0
    %350 = vmatpush1.msra.mxu0 0.0
    %351 = vmatprep.subr.mxu0 0.0
    %352 = vmatpush1.msra.mxu0 0.0
    %353 = vmatprep.subr.mxu0 %v224
    %354 = vmatpush1.msra.mxu0 %v223
    %355 = vmatprep.subr.mxu0 %v222
    %356 = vmatpush1.msra.mxu0 %v221
    %357 = vmatprep.subr.mxu0 %v220
    %358 = vmatpush1.msra.mxu0 %v219
    %359 = vmatprep.subr.mxu0 %v218
    %360 = vmatpush1.msra.mxu0 %v217
    %361 = vmatprep.subr.mxu0 %v216
    %362 = vmatpush1.msra.mxu0 %v215
    %363 = vmatprep.subr.mxu0 %v214
    %364 = vmatpush1.msra.mxu0 %v213
    %365 = vmatprep.subr.mxu0 %v212
    %366 = vmatpush1.msra.mxu0 %v211
    %367 = vmatprep.subr.mxu0 %v210
    %368 = vmatpush1.msra.mxu0 %v209
    %369 = vmatprep.subr.mxu0 0.0
    %370 = vmatpush2.msra.mxu0 0.0
    %371 = vmatprep.subr.mxu0 0.0
    %372 = vmatpush2.msra.mxu0 0.0
    %373 = vmatprep.subr.mxu0 0.0
    %374 = vmatpush2.msra.mxu0 0.0
    %375 = vmatprep.subr.mxu0 0.0
    %376 = vmatpush2.msra.mxu0 0.0
    %377 = vmatprep.subr.mxu0 0.0
    %378 = vmatpush2.msra.mxu0 0.0
    %379 = vmatprep.subr.mxu0 0.0
    %380 = vmatpush2.msra.mxu0 0.0
    %381 = vmatprep.subr.mxu0 0.0
    %382 = vmatpush2.msra.mxu0 0.0
    %383 = vmatprep.subr.mxu0 0.0
    %384 = vmatpush2.msra.mxu0 0.0
    %385 = vmatprep.subr.mxu0 0.0
    %386 = vmatpush2.msra.mxu0 0.0
    %387 = vmatprep.subr.mxu0 0.0
    %388 = vmatpush2.msra.mxu0 0.0
    %389 = vmatprep.subr.mxu0 0.0
    %390 = vmatpush2.msra.mxu0 0.0
    %391 = vmatprep.subr.mxu0 0.0
    %392 = vmatpush2.msra.mxu0 0.0
    %393 = vmatprep.subr.mxu0 0.0
    %394 = vmatpush2.msra.mxu0 0.0
    %395 = vmatprep.subr.mxu0 0.0
    %396 = vmatpush2.msra.mxu0 0.0
    %397 = vmatprep.subr.mxu0 0.0
    %398 = vmatpush2.msra.mxu0 0.0
    %399 = vmatprep.subr.mxu0 0.0
    %400 = vmatpush2.msra.mxu0 0.0
    %401 = vmatprep.mubr.f32.mxu0 0.0
    %402 = vmatmul.mubr.f32.gmra.mxu0 %v335
    %v403 = vpop.f32.mrf.mxu0
    %v404 = vadd.f32 %v332, %v403
    %v405 = vpop.f32.mrf.mxu0
    %v406 = vadd.f32 %v333, %v405
    %407 = vdwg.mxu0
    %v408 = vtanh.pop %v404
    %v409 = vtanh.pop %v406
    %v410 = vmul.f32 %v408, 0.5
    %v411 = vmul.f32 %v409, 0.5
    %v412 = vadd.f32 %v410, 0.5
    %v413 = vadd.f32 %v411, 0.5
    %415 = vrot.lane.b32.xlu0 %v326, 64
    %v416 = vpop.permute.xlu0 %415
    %v418 = vmul.f32 %v412, %v416
    %v419 = vmul.f32 %v412, %v409
    %421 = vrot.lane.b32.xlu0 %v419, 64
    %v422 = vpop.permute.xlu0 %421
    %v424 = vadd.f32 %v418, %v422
    %v425 = vtanh.pop %v424
    %v426 = vmul.f32 %v413, %v425
    %v427 = vld [vmem:[#allocation2 + $0x20] sm:$0xff]
    %v428 = vld [vmem:[#allocation2 + $0x28] sm:$0xff]
    %430 = vrot.lane.b32.xlu0 %v426, 64
    %v431 = vpop.permute.xlu0 %430
    %v432 = vsel %vm227, %v431, 0
    %434 = vmatprep.subr.mxu0 0.0
    %435 = vmatpush1.msra.mxu0 0.0
    %436 = vmatprep.subr.mxu0 0.0
    %437 = vmatpush1.msra.mxu0 0.0
    %438 = vmatprep.subr.mxu0 0.0
    %439 = vmatpush1.msra.mxu0 0.0
    %440 = vmatprep.subr.mxu0 0.0
    %441 = vmatpush1.msra.mxu0 0.0
    %442 = vmatprep.subr.mxu0 0.0
    %443 = vmatpush1.msra.mxu0 0.0
    %444 = vmatprep.subr.mxu0 0.0
    %445 = vmatpush1.msra.mxu0 0.0
    %446 = vmatprep.subr.mxu0 0.0
    %447 = vmatpush1.msra.mxu0 0.0
    %448 = vmatprep.subr.mxu0 0.0
    %449 = vmatpush1.msra.mxu0 0.0
    %450 = vmatprep.subr.mxu0 %v224
    %451 = vmatpush1.msra.mxu0 %v223
    %452 = vmatprep.subr.mxu0 %v222
    %453 = vmatpush1.msra.mxu0 %v221
    %454 = vmatprep.subr.mxu0 %v220
    %455 = vmatpush1.msra.mxu0 %v219
    %456 = vmatprep.subr.mxu0 %v218
    %457 = vmatpush1.msra.mxu0 %v217
    %458 = vmatprep.subr.mxu0 %v216
    %459 = vmatpush1.msra.mxu0 %v215
    %460 = vmatprep.subr.mxu0 %v214
    %461 = vmatpush1.msra.mxu0 %v213
    %462 = vmatprep.subr.mxu0 %v212
    %463 = vmatpush1.msra.mxu0 %v211
    %464 = vmatprep.subr.mxu0 %v210
    %465 = vmatpush1.msra.mxu0 %v209
    %466 = vmatprep.subr.mxu0 0.0
    %467 = vmatpush2.msra.mxu0 0.0
    %468 = vmatprep.subr.mxu0 0.0
    %469 = vmatpush2.msra.mxu0 0.0
    %470 = vmatprep.subr.mxu0 0.0
    %471 = vmatpush2.msra.mxu0 0.0
    %472 = vmatprep.subr.mxu0 0.0
    %473 = vmatpush2.msra.mxu0 0.0
    %474 = vmatprep.subr.mxu0 0.0
    %475 = vmatpush2.msra.mxu0 0.0
    %476 = vmatprep.subr.mxu0 0.0
    %477 = vmatpush2.msra.mxu0 0.0
    %478 = vmatprep.subr.mxu0 0.0
    %479 = vmatpush2.msra.mxu0 0.0
    %480 = vmatprep.subr.mxu0 0.0
    %481 = vmatpush2.msra.mxu0 0.0
    %482 = vmatprep.subr.mxu0 0.0
    %483 = vmatpush2.msra.mxu0 0.0
    %484 = vmatprep.subr.mxu0 0.0
    %485 = vmatpush2.msra.mxu0 0.0
    %486 = vmatprep.subr.mxu0 0.0
    %487 = vmatpush2.msra.mxu0 0.0
    %488 = vmatprep.subr.mxu0 0.0
    %489 = vmatpush2.msra.mxu0 0.0
    %490 = vmatprep.subr.mxu0 0.0
    %491 = vmatpush2.msra.mxu0 0.0
    %492 = vmatprep.subr.mxu0 0.0
    %493 = vmatpush2.msra.mxu0 0.0
    %494 = vmatprep.subr.mxu0 0.0
    %495 = vmatpush2.msra.mxu0 0.0
    %496 = vmatprep.subr.mxu0 0.0
    %497 = vmatpush2.msra.mxu0 0.0
    %498 = vmatprep.mubr.f32.mxu0 0.0
    %499 = vmatmul.mubr.f32.gmra.mxu0 %v432
    %v500 = vpop.f32.mrf.mxu0
    %v501 = vadd.f32 %v427, %v500
    %v502 = vpop.f32.mrf.mxu0
    %v503 = vadd.f32 %v428, %v502
    %504 = vdwg.mxu0
    %v505 = vtanh.pop %v501
    %v506 = vtanh.pop %v503
    %v507 = vmul.f32 %v505, 0.5
    %v508 = vmul.f32 %v506, 0.5
    %v509 = vadd.f32 %v507, 0.5
    %v510 = vadd.f32 %v508, 0.5
    %v511 = vmul.f32 %v509, %v424
    %v512 = vmul.f32 %v509, %v506
    %514 = vrot.lane.b32.xlu0 %v512, 64
    %v515 = vpop.permute.xlu0 %514
    %v517 = vadd.f32 %v511, %v515
    %v518 = vtanh.pop %v517
    %v519 = vmul.f32 %v510, %v518
    %v520 = vld [vmem:[#allocation2 + $0x30] sm:$0xff]
    %v521 = vld [vmem:[#allocation2 + $0x38] sm:$0xff]
    %523 = vrot.lane.b32.xlu0 %v519, 64
    %v524 = vpop.permute.xlu0 %523
    %v525 = vsel %vm227, %v524, 0
    %527 = vmatprep.subr.mxu0 0.0
    %528 = vmatpush1.msra.mxu0 0.0
    %529 = vmatprep.subr.mxu0 0.0
    %530 = vmatpush1.msra.mxu0 0.0
    %531 = vmatprep.subr.mxu0 0.0
    %532 = vmatpush1.msra.mxu0 0.0
    %533 = vmatprep.subr.mxu0 0.0
    %534 = vmatpush1.msra.mxu0 0.0
    %535 = vmatprep.subr.mxu0 0.0
    %536 = vmatpush1.msra.mxu0 0.0
    %537 = vmatprep.subr.mxu0 0.0
    %538 = vmatpush1.msra.mxu0 0.0
    %539 = vmatprep.subr.mxu0 0.0
    %540 = vmatpush1.msra.mxu0 0.0
    %541 = vmatprep.subr.mxu0 0.0
    %542 = vmatpush1.msra.mxu0 0.0
    %543 = vmatprep.subr.mxu0 %v224
    %544 = vmatpush1.msra.mxu0 %v223
    %545 = vmatprep.subr.mxu0 %v222
    %546 = vmatpush1.msra.mxu0 %v221
    %547 = vmatprep.subr.mxu0 %v220
    %548 = vmatpush1.msra.mxu0 %v219
    %549 = vmatprep.subr.mxu0 %v218
    %550 = vmatpush1.msra.mxu0 %v217
    %551 = vmatprep.subr.mxu0 %v216
    %552 = vmatpush1.msra.mxu0 %v215
    %553 = vmatprep.subr.mxu0 %v214
    %554 = vmatpush1.msra.mxu0 %v213
    %555 = vmatprep.subr.mxu0 %v212
    %556 = vmatpush1.msra.mxu0 %v211
    %557 = vmatprep.subr.mxu0 %v210
    %558 = vmatpush1.msra.mxu0 %v209
    %559 = vmatprep.subr.mxu0 0.0
    %560 = vmatpush2.msra.mxu0 0.0
    %561 = vmatprep.subr.mxu0 0.0
    %562 = vmatpush2.msra.mxu0 0.0
    %563 = vmatprep.subr.mxu0 0.0
    %564 = vmatpush2.msra.mxu0 0.0
    %565 = vmatprep.subr.mxu0 0.0
    %566 = vmatpush2.msra.mxu0 0.0
    %567 = vmatprep.subr.mxu0 0.0
    %568 = vmatpush2.msra.mxu0 0.0
    %569 = vmatprep.subr.mxu0 0.0
    %570 = vmatpush2.msra.mxu0 0.0
    %571 = vmatprep.subr.mxu0 0.0
    %572 = vmatpush2.msra.mxu0 0.0
    %573 = vmatprep.subr.mxu0 0.0
    %574 = vmatpush2.msra.mxu0 0.0
    %575 = vmatprep.subr.mxu0 0.0
    %576 = vmatpush2.msra.mxu0 0.0
    %577 = vmatprep.subr.mxu0 0.0
    %578 = vmatpush2.msra.mxu0 0.0
    %579 = vmatprep.subr.mxu0 0.0
    %580 = vmatpush2.msra.mxu0 0.0
    %581 = vmatprep.subr.mxu0 0.0
    %582 = vmatpush2.msra.mxu0 0.0
    %583 = vmatprep.subr.mxu0 0.0
    %584 = vmatpush2.msra.mxu0 0.0
    %585 = vmatprep.subr.mxu0 0.0
    %586 = vmatpush2.msra.mxu0 0.0
    %587 = vmatprep.subr.mxu0 0.0
    %588 = vmatpush2.msra.mxu0 0.0
    %589 = vmatprep.subr.mxu0 0.0
    %590 = vmatpush2.msra.mxu0 0.0
    %591 = vmatprep.mubr.f32.mxu0 0.0
    %592 = vmatmul.mubr.f32.gmra.mxu0 %v525
    %v593 = vpop.f32.mrf.mxu0
    %v594 = vadd.f32 %v520, %v593
    %v595 = vpop.f32.mrf.mxu0
    %v596 = vadd.f32 %v521, %v595
    %597 = vdwg.mxu0
    %v598 = vtanh.pop %v594
    %v599 = vtanh.pop %v596
    %v600 = vmul.f32 %v598, 0.5
    %v601 = vmul.f32 %v599, 0.5
    %v602 = vadd.f32 %v600, 0.5
    %v603 = vadd.f32 %v601, 0.5
    %v604 = vmul.f32 %v602, %v517
    %v605 = vmul.f32 %v602, %v599
    %607 = vrot.lane.b32.xlu0 %v605, 64
    %v608 = vpop.permute.xlu0 %607
    %v610 = vadd.f32 %v604, %v608
    %v611 = vtanh.pop %v610
    %v612 = vmul.f32 %v603, %v611
    %v613 = vld [vmem:[#allocation2 + $0x40] sm:$0xff]
    %v614 = vld [vmem:[#allocation2 + $0x48] sm:$0xff]
    %616 = vrot.lane.b32.xlu0 %v612, 64
    %v617 = vpop.permute.xlu0 %616
    %v618 = vsel %vm227, %v617, 0
    %620 = vmatprep.subr.mxu0 0.0
    %621 = vmatpush1.msra.mxu0 0.0
    %622 = vmatprep.subr.mxu0 0.0
    %623 = vmatpush1.msra.mxu0 0.0
    %624 = vmatprep.subr.mxu0 0.0
    %625 = vmatpush1.msra.mxu0 0.0
    %626 = vmatprep.subr.mxu0 0.0
    %627 = vmatpush1.msra.mxu0 0.0
    %628 = vmatprep.subr.mxu0 0.0
    %629 = vmatpush1.msra.mxu0 0.0
    %630 = vmatprep.subr.mxu0 0.0
    %631 = vmatpush1.msra.mxu0 0.0
    %632 = vmatprep.subr.mxu0 0.0
    %633 = vmatpush1.msra.mxu0 0.0
    %634 = vmatprep.subr.mxu0 0.0
    %635 = vmatpush1.msra.mxu0 0.0
    %636 = vmatprep.subr.mxu0 %v224
    %637 = vmatpush1.msra.mxu0 %v223
    %638 = vmatprep.subr.mxu0 %v222
    %639 = vmatpush1.msra.mxu0 %v221
    %640 = vmatprep.subr.mxu0 %v220
    %641 = vmatpush1.msra.mxu0 %v219
    %642 = vmatprep.subr.mxu0 %v218
    %643 = vmatpush1.msra.mxu0 %v217
    %644 = vmatprep.subr.mxu0 %v216
    %645 = vmatpush1.msra.mxu0 %v215
    %646 = vmatprep.subr.mxu0 %v214
    %647 = vmatpush1.msra.mxu0 %v213
    %648 = vmatprep.subr.mxu0 %v212
    %649 = vmatpush1.msra.mxu0 %v211
    %650 = vmatprep.subr.mxu0 %v210
    %651 = vmatpush1.msra.mxu0 %v209
    %652 = vmatprep.subr.mxu0 0.0
    %653 = vmatpush2.msra.mxu0 0.0
    %654 = vmatprep.subr.mxu0 0.0
    %655 = vmatpush2.msra.mxu0 0.0
    %656 = vmatprep.subr.mxu0 0.0
    %657 = vmatpush2.msra.mxu0 0.0
    %658 = vmatprep.subr.mxu0 0.0
    %659 = vmatpush2.msra.mxu0 0.0
    %660 = vmatprep.subr.mxu0 0.0
    %661 = vmatpush2.msra.mxu0 0.0
    %662 = vmatprep.subr.mxu0 0.0
    %663 = vmatpush2.msra.mxu0 0.0
    %664 = vmatprep.subr.mxu0 0.0
    %665 = vmatpush2.msra.mxu0 0.0
    %666 = vmatprep.subr.mxu0 0.0
    %667 = vmatpush2.msra.mxu0 0.0
    %668 = vmatprep.subr.mxu0 0.0
    %669 = vmatpush2.msra.mxu0 0.0
    %670 = vmatprep.subr.mxu0 0.0
    %671 = vmatpush2.msra.mxu0 0.0
    %672 = vmatprep.subr.mxu0 0.0
    %673 = vmatpush2.msra.mxu0 0.0
    %674 = vmatprep.subr.mxu0 0.0
    %675 = vmatpush2.msra.mxu0 0.0
    %676 = vmatprep.subr.mxu0 0.0
    %677 = vmatpush2.msra.mxu0 0.0
    %678 = vmatprep.subr.mxu0 0.0
    %679 = vmatpush2.msra.mxu0 0.0
    %680 = vmatprep.subr.mxu0 0.0
    %681 = vmatpush2.msra.mxu0 0.0
    %682 = vmatprep.subr.mxu0 0.0
    %683 = vmatpush2.msra.mxu0 0.0
    %684 = vmatprep.mubr.f32.mxu0 0.0
    %685 = vmatmul.mubr.f32.gmra.mxu0 %v618
    %v686 = vpop.f32.mrf.mxu0
    %v687 = vadd.f32 %v613, %v686
    %v688 = vpop.f32.mrf.mxu0
    %v689 = vadd.f32 %v614, %v688
    %690 = vdwg.mxu0
    %v691 = vtanh.pop %v687
    %v692 = vtanh.pop %v689
    %v693 = vmul.f32 %v691, 0.5
    %v694 = vmul.f32 %v692, 0.5
    %v695 = vadd.f32 %v693, 0.5
    %v696 = vadd.f32 %v694, 0.5
    %v697 = vmul.f32 %v695, %v610
    %v698 = vmul.f32 %v695, %v692
    %700 = vrot.lane.b32.xlu0 %v698, 64
    %v701 = vpop.permute.xlu0 %700
    %v703 = vadd.f32 %v697, %v701
    %v704 = vtanh.pop %v703
    %v705 = vmul.f32 %v696, %v704
    %v706 = vld [vmem:[#allocation2 + $0x50] sm:$0xff]
    %v707 = vld [vmem:[#allocation2 + $0x58] sm:$0xff]
    %709 = vrot.lane.b32.xlu0 %v705, 64
    %v710 = vpop.permute.xlu0 %709
    %v711 = vsel %vm227, %v710, 0
    %713 = vmatprep.subr.mxu0 0.0
    %714 = vmatpush1.msra.mxu0 0.0
    %715 = vmatprep.subr.mxu0 0.0
    %716 = vmatpush1.msra.mxu0 0.0
    %717 = vmatprep.subr.mxu0 0.0
    %718 = vmatpush1.msra.mxu0 0.0
    %719 = vmatprep.subr.mxu0 0.0
    %720 = vmatpush1.msra.mxu0 0.0
    %721 = vmatprep.subr.mxu0 0.0
    %722 = vmatpush1.msra.mxu0 0.0
    %723 = vmatprep.subr.mxu0 0.0
    %724 = vmatpush1.msra.mxu0 0.0
    %725 = vmatprep.subr.mxu0 0.0
    %726 = vmatpush1.msra.mxu0 0.0
    %727 = vmatprep.subr.mxu0 0.0
    %728 = vmatpush1.msra.mxu0 0.0
    %729 = vmatprep.subr.mxu0 %v224
    %730 = vmatpush1.msra.mxu0 %v223
    %731 = vmatprep.subr.mxu0 %v222
    %732 = vmatpush1.msra.mxu0 %v221
    %733 = vmatprep.subr.mxu0 %v220
    %734 = vmatpush1.msra.mxu0 %v219
    %735 = vmatprep.subr.mxu0 %v218
    %736 = vmatpush1.msra.mxu0 %v217
    %737 = vmatprep.subr.mxu0 %v216
    %738 = vmatpush1.msra.mxu0 %v215
    %739 = vmatprep.subr.mxu0 %v214
    %740 = vmatpush1.msra.mxu0 %v213
    %741 = vmatprep.subr.mxu0 %v212
    %742 = vmatpush1.msra.mxu0 %v211
    %743 = vmatprep.subr.mxu0 %v210
    %744 = vmatpush1.msra.mxu0 %v209
    %745 = vmatprep.subr.mxu0 0.0
    %746 = vmatpush2.msra.mxu0 0.0
    %747 = vmatprep.subr.mxu0 0.0
    %748 = vmatpush2.msra.mxu0 0.0
    %749 = vmatprep.subr.mxu0 0.0
    %750 = vmatpush2.msra.mxu0 0.0
    %751 = vmatprep.subr.mxu0 0.0
    %752 = vmatpush2.msra.mxu0 0.0
    %753 = vmatprep.subr.mxu0 0.0
    %754 = vmatpush2.msra.mxu0 0.0
    %755 = vmatprep.subr.mxu0 0.0
    %756 = vmatpush2.msra.mxu0 0.0
    %757 = vmatprep.subr.mxu0 0.0
    %758 = vmatpush2.msra.mxu0 0.0
    %759 = vmatprep.subr.mxu0 0.0
    %760 = vmatpush2.msra.mxu0 0.0
    %761 = vmatprep.subr.mxu0 0.0
    %762 = vmatpush2.msra.mxu0 0.0
    %763 = vmatprep.subr.mxu0 0.0
    %764 = vmatpush2.msra.mxu0 0.0
    %765 = vmatprep.subr.mxu0 0.0
    %766 = vmatpush2.msra.mxu0 0.0
    %767 = vmatprep.subr.mxu0 0.0
    %768 = vmatpush2.msra.mxu0 0.0
    %769 = vmatprep.subr.mxu0 0.0
    %770 = vmatpush2.msra.mxu0 0.0
    %771 = vmatprep.subr.mxu0 0.0
    %772 = vmatpush2.msra.mxu0 0.0
    %773 = vmatprep.subr.mxu0 0.0
    %774 = vmatpush2.msra.mxu0 0.0
    %775 = vmatprep.subr.mxu0 0.0
    %776 = vmatpush2.msra.mxu0 0.0
    %777 = vmatprep.mubr.f32.mxu0 0.0
    %778 = vmatmul.mubr.f32.gmra.mxu0 %v711
    %v779 = vpop.f32.mrf.mxu0
    %v780 = vadd.f32 %v706, %v779
    %v781 = vpop.f32.mrf.mxu0
    %v782 = vadd.f32 %v707, %v781
    %783 = vdwg.mxu0
    %v784 = vtanh.pop %v780
    %v785 = vtanh.pop %v782
    %v786 = vmul.f32 %v784, 0.5
    %v787 = vmul.f32 %v785, 0.5
    %v788 = vadd.f32 %v786, 0.5
    %v789 = vadd.f32 %v787, 0.5
    %v790 = vmul.f32 %v788, %v703
    %v791 = vmul.f32 %v788, %v785
    %793 = vrot.lane.b32.xlu0 %v791, 64
    %v794 = vpop.permute.xlu0 %793
    %v796 = vadd.f32 %v790, %v794
    %v797 = vtanh.pop %v796
    %v798 = vmul.f32 %v789, %v797
    %v799 = vld [vmem:[#allocation2 + $0x60] sm:$0xff]
    %v800 = vld [vmem:[#allocation2 + $0x68] sm:$0xff]
    %802 = vrot.lane.b32.xlu0 %v798, 64
    %v803 = vpop.permute.xlu0 %802
    %v804 = vsel %vm227, %v803, 0
    %806 = vmatprep.subr.mxu0 0.0
    %807 = vmatpush1.msra.mxu0 0.0
    %808 = vmatprep.subr.mxu0 0.0
    %809 = vmatpush1.msra.mxu0 0.0
    %810 = vmatprep.subr.mxu0 0.0
    %811 = vmatpush1.msra.mxu0 0.0
    %812 = vmatprep.subr.mxu0 0.0
    %813 = vmatpush1.msra.mxu0 0.0
    %814 = vmatprep.subr.mxu0 0.0
    %815 = vmatpush1.msra.mxu0 0.0
    %816 = vmatprep.subr.mxu0 0.0
    %817 = vmatpush1.msra.mxu0 0.0
    %818 = vmatprep.subr.mxu0 0.0
    %819 = vmatpush1.msra.mxu0 0.0
    %820 = vmatprep.subr.mxu0 0.0
    %821 = vmatpush1.msra.mxu0 0.0
    %822 = vmatprep.subr.mxu0 %v224
    %823 = vmatpush1.msra.mxu0 %v223
    %824 = vmatprep.subr.mxu0 %v222
    %825 = vmatpush1.msra.mxu0 %v221
    %826 = vmatprep.subr.mxu0 %v220
    %827 = vmatpush1.msra.mxu0 %v219
    %828 = vmatprep.subr.mxu0 %v218
    %829 = vmatpush1.msra.mxu0 %v217
    %830 = vmatprep.subr.mxu0 %v216
    %831 = vmatpush1.msra.mxu0 %v215
    %832 = vmatprep.subr.mxu0 %v214
    %833 = vmatpush1.msra.mxu0 %v213
    %834 = vmatprep.subr.mxu0 %v212
    %835 = vmatpush1.msra.mxu0 %v211
    %836 = vmatprep.subr.mxu0 %v210
    %837 = vmatpush1.msra.mxu0 %v209
    %838 = vmatprep.subr.mxu0 0.0
    %839 = vmatpush2.msra.mxu0 0.0
    %840 = vmatprep.subr.mxu0 0.0
    %841 = vmatpush2.msra.mxu0 0.0
    %842 = vmatprep.subr.mxu0 0.0
    %843 = vmatpush2.msra.mxu0 0.0
    %844 = vmatprep.subr.mxu0 0.0
    %845 = vmatpush2.msra.mxu0 0.0
    %846 = vmatprep.subr.mxu0 0.0
    %847 = vmatpush2.msra.mxu0 0.0
    %848 = vmatprep.subr.mxu0 0.0
    %849 = vmatpush2.msra.mxu0 0.0
    %850 = vmatprep.subr.mxu0 0.0
    %851 = vmatpush2.msra.mxu0 0.0
    %852 = vmatprep.subr.mxu0 0.0
    %853 = vmatpush2.msra.mxu0 0.0
    %854 = vmatprep.subr.mxu0 0.0
    %855 = vmatpush2.msra.mxu0 0.0
    %856 = vmatprep.subr.mxu0 0.0
    %857 = vmatpush2.msra.mxu0 0.0
    %858 = vmatprep.subr.mxu0 0.0
    %859 = vmatpush2.msra.mxu0 0.0
    %860 = vmatprep.subr.mxu0 0.0
    %861 = vmatpush2.msra.mxu0 0.0
    %862 = vmatprep.subr.mxu0 0.0
    %863 = vmatpush2.msra.mxu0 0.0
    %864 = vmatprep.subr.mxu0 0.0
    %865 = vmatpush2.msra.mxu0 0.0
    %866 = vmatprep.subr.mxu0 0.0
    %867 = vmatpush2.msra.mxu0 0.0
    %868 = vmatprep.subr.mxu0 0.0
    %869 = vmatpush2.msra.mxu0 0.0
    %870 = vmatprep.mubr.f32.mxu0 0.0
    %871 = vmatmul.mubr.f32.gmra.mxu0 %v804
    %v872 = vpop.f32.mrf.mxu0
    %v873 = vadd.f32 %v799, %v872
    %v874 = vpop.f32.mrf.mxu0
    %v875 = vadd.f32 %v800, %v874
    %876 = vdwg.mxu0
    %v877 = vtanh.pop %v873
    %v878 = vtanh.pop %v875
    %v879 = vmul.f32 %v877, 0.5
    %v880 = vmul.f32 %v878, 0.5
    %v881 = vadd.f32 %v879, 0.5
    %v882 = vadd.f32 %v880, 0.5
    %v883 = vmul.f32 %v881, %v796
    %v884 = vmul.f32 %v881, %v878
    %886 = vrot.lane.b32.xlu0 %v884, 64
    %v887 = vpop.permute.xlu0 %886
    %v889 = vadd.f32 %v883, %v887
    %v890 = vtanh.pop %v889
    %v891 = vmul.f32 %v882, %v890
    %v892 = vld [vmem:[#allocation2 + $0x70] sm:$0xff]
    %v893 = vld [vmem:[#allocation2 + $0x78] sm:$0xff]
    %895 = vrot.lane.b32.xlu0 %v891, 64
    %v896 = vpop.permute.xlu0 %895
    %v897 = vsel %vm227, %v896, 0
    %899 = vmatprep.subr.mxu0 0.0
    %900 = vmatpush1.msra.mxu0 0.0
    %901 = vmatprep.subr.mxu0 0.0
    %902 = vmatpush1.msra.mxu0 0.0
    %903 = vmatprep.subr.mxu0 0.0
    %904 = vmatpush1.msra.mxu0 0.0
    %905 = vmatprep.subr.mxu0 0.0
    %906 = vmatpush1.msra.mxu0 0.0
    %907 = vmatprep.subr.mxu0 0.0
    %908 = vmatpush1.msra.mxu0 0.0
    %909 = vmatprep.subr.mxu0 0.0
    %910 = vmatpush1.msra.mxu0 0.0
    %911 = vmatprep.subr.mxu0 0.0
    %912 = vmatpush1.msra.mxu0 0.0
    %913 = vmatprep.subr.mxu0 0.0
    %914 = vmatpush1.msra.mxu0 0.0
    %915 = vmatprep.subr.mxu0 %v224
    %916 = vmatpush1.msra.mxu0 %v223
    %917 = vmatprep.subr.mxu0 %v222
    %918 = vmatpush1.msra.mxu0 %v221
    %919 = vmatprep.subr.mxu0 %v220
    %920 = vmatpush1.msra.mxu0 %v219
    %921 = vmatprep.subr.mxu0 %v218
    %922 = vmatpush1.msra.mxu0 %v217
    %923 = vmatprep.subr.mxu0 %v216
    %924 = vmatpush1.msra.mxu0 %v215
    %925 = vmatprep.subr.mxu0 %v214
    %926 = vmatpush1.msra.mxu0 %v213
    %927 = vmatprep.subr.mxu0 %v212
    %928 = vmatpush1.msra.mxu0 %v211
    %929 = vmatprep.subr.mxu0 %v210
    %930 = vmatpush1.msra.mxu0 %v209
    %931 = vmatprep.subr.mxu0 0.0
    %932 = vmatpush2.msra.mxu0 0.0
    %933 = vmatprep.subr.mxu0 0.0
    %934 = vmatpush2.msra.mxu0 0.0
    %935 = vmatprep.subr.mxu0 0.0
    %936 = vmatpush2.msra.mxu0 0.0
    %937 = vmatprep.subr.mxu0 0.0
    %938 = vmatpush2.msra.mxu0 0.0
    %939 = vmatprep.subr.mxu0 0.0
    %940 = vmatpush2.msra.mxu0 0.0
    %941 = vmatprep.subr.mxu0 0.0
    %942 = vmatpush2.msra.mxu0 0.0
    %943 = vmatprep.subr.mxu0 0.0
    %944 = vmatpush2.msra.mxu0 0.0
    %945 = vmatprep.subr.mxu0 0.0
    %946 = vmatpush2.msra.mxu0 0.0
    %947 = vmatprep.subr.mxu0 0.0
    %948 = vmatpush2.msra.mxu0 0.0
    %949 = vmatprep.subr.mxu0 0.0
    %950 = vmatpush2.msra.mxu0 0.0
    %951 = vmatprep.subr.mxu0 0.0
    %952 = vmatpush2.msra.mxu0 0.0
    %953 = vmatprep.subr.mxu0 0.0
    %954 = vmatpush2.msra.mxu0 0.0
    %955 = vmatprep.subr.mxu0 0.0
    %956 = vmatpush2.msra.mxu0 0.0
    %957 = vmatprep.subr.mxu0 0.0
    %958 = vmatpush2.msra.mxu0 0.0
    %959 = vmatprep.subr.mxu0 0.0
    %960 = vmatpush2.msra.mxu0 0.0
    %961 = vmatprep.subr.mxu0 0.0
    %962 = vmatpush2.msra.mxu0 0.0
    %963 = vmatprep.mubr.f32.mxu0 0.0
    %964 = vmatmul.mubr.f32.gmra.mxu0 %v897
    %v965 = vpop.f32.mrf.mxu0
    %v966 = vadd.f32 %v892, %v965
    %v967 = vpop.f32.mrf.mxu0
    %v968 = vadd.f32 %v893, %v967
    %969 = vdwg.mxu0
    %v970 = vtanh.pop %v966
    %v971 = vtanh.pop %v968
    %v972 = vmul.f32 %v970, 0.5
    %v973 = vmul.f32 %v971, 0.5
    %v974 = vadd.f32 %v972, 0.5
    %v975 = vadd.f32 %v973, 0.5
    %v976 = vmul.f32 %v974, %v889
    %v977 = vmul.f32 %v974, %v971
    %979 = vrot.lane.b32.xlu0 %v977, 64
    %v980 = vpop.permute.xlu0 %979
    %v982 = vadd.f32 %v976, %v980
    %v983 = vtanh.pop %v982
    %v984 = vmul.f32 %v975, %v983
    %986 = vrot.lane.b32.xlu0 %v984, 64
    %v987 = vpop.permute.xlu0 %986
    %v988 = vsel %vm227, %v987, 0
    %990 = vmatprep.subr.mxu0 0.0
    %991 = vmatpush1.msra.mxu0 0.0
    %992 = vmatprep.subr.mxu0 0.0
    %993 = vmatpush1.msra.mxu0 0.0
    %994 = vmatprep.subr.mxu0 0.0
    %995 = vmatpush1.msra.mxu0 0.0
    %996 = vmatprep.subr.mxu0 0.0
    %997 = vmatpush1.msra.mxu0 0.0
    %998 = vmatprep.subr.mxu0 0.0
    %999 = vmatpush1.msra.mxu0 0.0
    %1000 = vmatprep.subr.mxu0 0.0
    %1001 = vmatpush1.msra.mxu0 0.0
    %1002 = vmatprep.subr.mxu0 0.0
    %1003 = vmatpush1.msra.mxu0 0.0
    %1004 = vmatprep.subr.mxu0 0.0
    %1005 = vmatpush1.msra.mxu0 0.0
    %1006 = vmatprep.subr.mxu0 %v224
    %1007 = vmatpush1.msra.mxu0 %v223
    %1008 = vmatprep.subr.mxu0 %v222
    %1009 = vmatpush1.msra.mxu0 %v221
    %1010 = vmatprep.subr.mxu0 %v220
    %1011 = vmatpush1.msra.mxu0 %v219
    %1012 = vmatprep.subr.mxu0 %v218
    %1013 = vmatpush1.msra.mxu0 %v217
    %1014 = vmatprep.subr.mxu0 %v216
    %1015 = vmatpush1.msra.mxu0 %v215
    %1016 = vmatprep.subr.mxu0 %v214
    %1017 = vmatpush1.msra.mxu0 %v213
    %1018 = vmatprep.subr.mxu0 %v212
    %1019 = vmatpush1.msra.mxu0 %v211
    %1020 = vmatprep.subr.mxu0 %v210
    %1021 = vmatpush1.msra.mxu0 %v209
    %1022 = vmatprep.subr.mxu0 0.0
    %1023 = vmatpush2.msra.mxu0 0.0
    %1024 = vmatprep.subr.mxu0 0.0
    %1025 = vmatpush2.msra.mxu0 0.0
    %1026 = vmatprep.subr.mxu0 0.0
    %1027 = vmatpush2.msra.mxu0 0.0
    %1028 = vmatprep.subr.mxu0 0.0
    %1029 = vmatpush2.msra.mxu0 0.0
    %1030 = vmatprep.subr.mxu0 0.0
    %1031 = vmatpush2.msra.mxu0 0.0
    %1032 = vmatprep.subr.mxu0 0.0
    %1033 = vmatpush2.msra.mxu0 0.0
    %1034 = vmatprep.subr.mxu0 0.0
    %1035 = vmatpush2.msra.mxu0 0.0
    %1036 = vmatprep.subr.mxu0 0.0
    %1037 = vmatpush2.msra.mxu0 0.0
    %1038 = vmatprep.subr.mxu0 0.0
    %1039 = vmatpush2.msra.mxu0 0.0
    %1040 = vmatprep.subr.mxu0 0.0
    %1041 = vmatpush2.msra.mxu0 0.0
    %1042 = vmatprep.subr.mxu0 0.0
    %1043 = vmatpush2.msra.mxu0 0.0
    %1044 = vmatprep.subr.mxu0 0.0
    %1045 = vmatpush2.msra.mxu0 0.0
    %1046 = vmatprep.subr.mxu0 0.0
    %1047 = vmatpush2.msra.mxu0 0.0
    %1048 = vmatprep.subr.mxu0 0.0
    %1049 = vmatpush2.msra.mxu0 0.0
    %1050 = vmatprep.subr.mxu0 0.0
    %1051 = vmatpush2.msra.mxu0 0.0
    %1052 = vmatprep.subr.mxu0 0.0
    %1053 = vmatpush2.msra.mxu0 0.0
    %1054 = vmatprep.mubr.f32.mxu0 0.0
    %1055 = vmatmul.mubr.f32.gmra.mxu0 %v988
    %v1056 = vpop.f32.mrf.mxu0
    %v1057 = vadd.f32 %v892, %v1056
    %v1058 = vpop.f32.mrf.mxu0
    %v1059 = vadd.f32 %v893, %v1058
    %1060 = vdwg.mxu0
    %v1061 = vtanh.pop %v1057
    %v1062 = vtanh.pop %v1059
    %v1063 = vmul.f32 %v1061, 0.5
    %v1064 = vmul.f32 %v1062, 0.5
    %v1065 = vadd.f32 %v1063, 0.5
    %v1066 = vadd.f32 %v1064, 0.5
    %v1067 = vmul.f32 %v1065, %v982
    %v1068 = vmul.f32 %v1065, %v1062
    %1070 = vrot.lane.b32.xlu0 %v1068, 64
    %v1071 = vpop.permute.xlu0 %1070
    %v1073 = vadd.f32 %v1067, %v1071
    %v1074 = vtanh.pop %v1073
    %v1075 = vmul.f32 %v1066, %v1074
    %vm1076 = vcmp.ge.s32.totalorder %v318, 32
    %vm1077 = vcmp.lt.s32.totalorder %v318, 64
    %vm1078 = vmand %vm1076, %vm1077
    %1080 = vrot.lane.b32.xlu0 %v1075, 64
    %v1081 = vpop.permute.xlu0 %1080
    %v1084 = vsel %vm1078, %v1081, %v987
    %v1085 = vld [vmem:[#allocation3 + $0xa0] sm:$0xff]
    %v1086 = vld [vmem:[#allocation3 + $0xb0] sm:$0xff]
    %v1087 = vld [vmem:[#allocation3 + $0xc0] sm:$0xff]
    %v1088 = vld [vmem:[#allocation3 + $0xd0] sm:$0xff]
    %v1089 = vld [vmem:[#allocation3 + $0xe0] ss:$0 sm:$0xff]
    %1091 = vrot.lane.b32.xlu0 %v1084, 96
    %v1092 = vpop.permute.xlu0 %1091
    %vm1093 = vcmask 261120
    %v1094 = vsel %vm1093, %v1092, 0
    %1096 = vmatprep.subr.mxu0 0.0
    %1097 = vmatpush1.msra.mxu0 0.0
    %1098 = vmatprep.subr.mxu0 0.0
    %1099 = vmatpush1.msra.mxu0 0.0
    %1100 = vmatprep.subr.mxu0 0.0
    %1101 = vmatpush1.msra.mxu0 0.0
    %1102 = vmatprep.subr.mxu0 0.0
    %1103 = vmatpush1.msra.mxu0 0.0
    %1104 = vmatprep.subr.mxu0 0.0
    %1105 = vmatpush1.msra.mxu0 0.0
    %1106 = vmatprep.subr.mxu0 0.0
    %1107 = vmatpush1.msra.mxu0 0.0
    %1108 = vmatprep.subr.mxu0 0.0
    %1109 = vmatpush1.msra.mxu0 0.0
    %1110 = vmatprep.subr.mxu0 0.0
    %1111 = vmatpush1.msra.mxu0 0.0
    %1112 = vmatprep.subr.mxu0 0.0
    %1113 = vmatpush1.msra.mxu0 0.0
    %1114 = vmatprep.subr.mxu0 0.0
    %1115 = vmatpush1.msra.mxu0 0.0
    %1116 = vmatprep.subr.mxu0 0.0
    %1117 = vmatpush1.msra.mxu0 0.0
    %1118 = vmatprep.subr.mxu0 0.0
    %1119 = vmatpush1.msra.mxu0 0.0
    %1120 = vmatprep.subr.mxu0 0.0
    %1121 = vmatpush1.msra.mxu0 %v1088
    %1122 = vmatprep.subr.mxu0 0.0
    %1123 = vmatpush1.msra.mxu0 %v1087
    %1124 = vmatprep.subr.mxu0 0.0
    %1125 = vmatpush1.msra.mxu0 %v1086
    %1126 = vmatprep.subr.mxu0 0.0
    %1127 = vmatpush1.msra.mxu0 %v1085
    %1128 = vmatprep.subr.mxu0 0.0
    %1129 = vmatpush2.msra.mxu0 0.0
    %1130 = vmatprep.subr.mxu0 0.0
    %1131 = vmatpush2.msra.mxu0 0.0
    %1132 = vmatprep.subr.mxu0 0.0
    %1133 = vmatpush2.msra.mxu0 0.0
    %1134 = vmatprep.subr.mxu0 0.0
    %1135 = vmatpush2.msra.mxu0 0.0
    %1136 = vmatprep.subr.mxu0 0.0
    %1137 = vmatpush2.msra.mxu0 0.0
    %1138 = vmatprep.subr.mxu0 0.0
    %1139 = vmatpush2.msra.mxu0 0.0
    %1140 = vmatprep.subr.mxu0 0.0
    %1141 = vmatpush2.msra.mxu0 0.0
    %1142 = vmatprep.subr.mxu0 0.0
    %1143 = vmatpush2.msra.mxu0 0.0
    %1144 = vmatprep.subr.mxu0 0.0
    %1145 = vmatpush2.msra.mxu0 0.0
    %1146 = vmatprep.subr.mxu0 0.0
    %1147 = vmatpush2.msra.mxu0 0.0
    %1148 = vmatprep.subr.mxu0 0.0
    %1149 = vmatpush2.msra.mxu0 0.0
    %1150 = vmatprep.subr.mxu0 0.0
    %1151 = vmatpush2.msra.mxu0 0.0
    %1152 = vmatprep.subr.mxu0 0.0
    %1153 = vmatpush2.msra.mxu0 0.0
    %1154 = vmatprep.subr.mxu0 0.0
    %1155 = vmatpush2.msra.mxu0 0.0
    %1156 = vmatprep.subr.mxu0 0.0
    %1157 = vmatpush2.msra.mxu0 0.0
    %1158 = vmatprep.subr.mxu0 0.0
    %1159 = vmatpush2.msra.mxu0 0.0
    %1160 = vmatprep.mubr.f32.mxu0 0.0
    %1161 = vmatmul.mubr.f32.gmra.mxu0 %v1094
    %v1162 = vpop.f32.mrf.mxu0
    %v1163 = vadd.f32 %v1089, %v1162
    %v1164 = vpop.f32.mrf.mxu0
    %1165 = vdwg.mxu0
    %v1166 = vmax.f32 %v1163, 0.0
    %v1167 = vld [vmem:[#allocation3 + $0xf0] ss:$0 sm:$0xff]
    %v1168 = vmul.f32 %v1166, %v1167
    %v1169 = vsel %vm1093, %v1168, 0.0
    %1170 = vadd.xlane.f32.xlu0 %v1169
    %v1171 = vpop.xlane.xlu0 %1170
    %v1172 = vld [vmem:[#allocation3 + $0x100] ss:$0 sm:$0xff]
    %v1173 = vadd.f32 %v1171, %v1172
    %v1174 = vtanh.pop %v1173
    %v1175 = vmul.f32 %v1174, 0.03
    %vm1176 = vcmask 7168
    %1177 = vst.msk [vmem:[%s2] sm:$0xff] %vm1176, %v1175
    // Predicated region
    $region14: #{_forward.1} parent=1 // pred_check
      _
    $region15: #{_forward.1} parent=1 // pred_check_branch
      %1179 = sbr.rel (0) target = $region17
    $region16: #{_forward.1} parent=1 // pred_region
      _
    $region17: #{_forward.1} parent=1 // pred_fallthru
      _
    // Predicated region
    $region18: #{_forward.1} parent=1 // pred_check
      _
    $region19: #{_forward.1} parent=1 // pred_check_branch
      %1181 = sbr.rel (0) target = $region21
    $region20: #{_forward.1} parent=1 // pred_region
      _
    $region21: #{_forward.1} parent=1 // pred_fallthru
      _
    %1182 = vsyncpa [#allocation4], 1

</llo_original>
